<compile_context>
chip_gen: v7x
topology: tpu7x:2x2x1
jax: 0.10.0
libtpu: 0.0.40
codegen_flags: <defaults>
</compile_context>

<pallas_src>
import functools

import jax
import jax.numpy as jnp
from jax.experimental import pallas as pl
from jax.experimental.pallas import tpu as pltpu


# ------------------------------ fused kernel ----------------------------------

def _lite_stem_kernel(x_ref, w1_ref, b1_ref, w2_ref, b2_ref, w3_ref, b3_ref,
                      o_ref, pad2_ref, pad3_ref, *, Ho, Wo, C1, C2):
    f32 = jnp.float32
    bf16 = jnp.bfloat16

    # ---- Stage 1: 3x3/s2 conv expressed as a 2x2/s1 conv over the
    #      space-to-depth input (4 tap matmuls, true K = 4*Cin) + BN + ReLU.
    xv = x_ref[0]                                           # (Ho+1, Wo+1, 4*Cin)
    acc1 = jnp.zeros((Ho * Wo, C1), f32)
    for dr in range(2):
        for dc in range(2):
            tap = xv[dr:dr + Ho, dc:dc + Wo, :].reshape(Ho * Wo, -1)
            acc1 = acc1 + jnp.dot(tap.astype(bf16), w1_ref[2 * dr + dc],
                                  preferred_element_type=f32)
    y1 = jnp.maximum(acc1 + b1_ref[...], 0.0)               # (Ho*Wo, C1) f32

    # ---- Stage 2: 3x3/s1 conv + BN + ReLU.  9 shifted-tap matmuls read from a
    #      zero-padded VMEM scratch (no HBM im2col, true K = C1).
    pad2_ref[...] = jnp.zeros_like(pad2_ref)
    pad2_ref[1:1 + Ho, 1:1 + Wo, :] = y1.reshape(Ho, Wo, C1)
    acc2 = jnp.zeros((Ho * Wo, C2), f32)
    for dy in range(3):
        for dx in range(3):
            tap = pad2_ref[dy:dy + Ho, dx:dx + Wo, :].reshape(Ho * Wo, C1)
            acc2 = acc2 + jnp.dot(tap.astype(bf16), w2_ref[3 * dy + dx],
                                  preferred_element_type=f32)
    y2 = jnp.maximum(acc2 + b2_ref[...], 0.0)               # (Ho*Wo, C2) f32

    # ---- Stage 3: depthwise 3x3 conv + BN + ReLU.  9-tap VPU MAC from a
    #      zero-padded VMEM scratch, f32 accumulation.
    pad3_ref[...] = jnp.zeros_like(pad3_ref)
    pad3_ref[1:1 + Ho, 1:1 + Wo, :] = y2.reshape(Ho, Wo, C2)
    acc3 = jnp.zeros((Ho, Wo, C2), f32)
    for dy in range(3):
        for dx in range(3):
            tap = pad3_ref[dy:dy + Ho, dx:dx + Wo, :]       # (Ho, Wo, C2)
            acc3 = acc3 + tap * w3_ref[3 * dy + dx]         # (1, C2) broadcast
    y3 = jnp.maximum(acc3 + b3_ref[...], 0.0)
    o_ref[...] = y3.reshape(o_ref.shape).astype(o_ref.dtype)


# ------------------------------ wrapper ----------------------------------------

def _fold_bn(bn, eps):
    gamma, beta, mean, var = bn
    scale = gamma / jnp.sqrt(var + eps)
    bias = beta - mean * scale
    return scale, bias


def _prep_params(params, eps=1e-5):
    """Fold BN scale into conv weights; lay weights out tap-major for the kernel."""
    w1, w2, w3 = params["w1"], params["w2"], params["w3"]
    s1, b1 = _fold_bn(params["bn1"], eps)
    s2, b2 = _fold_bn(params["bn2"], eps)
    s3, b3 = _fold_bn(params["bn3"], eps)

    C1, Cin = w1.shape[0], w1.shape[1]
    C2 = w2.shape[0]

    # conv1 (stride 2) in space-to-depth form: 2x2 taps over 4*Cin channels.
    wt1 = jnp.transpose(w1, (2, 3, 1, 0)) * s1              # (3, 3, Cin, C1)
    w1_s2d = jnp.zeros((2, 2, 2, 2, Cin, C1), w1.dtype)     # (dr, dc, sr, sc, ci, co)
    for dy in range(3):
        for dx in range(3):
            w1_s2d = w1_s2d.at[dy // 2, dx // 2, dy % 2, dx % 2].set(wt1[dy, dx])
    w1_taps = w1_s2d.reshape(4, 4 * Cin, C1).astype(jnp.bfloat16)

    # conv2 (stride 1): 3x3 taps of (C1, C2) matrices.
    w2_taps = (jnp.transpose(w2, (2, 3, 1, 0)) * s2).reshape(9, C1, C2)
    w2_taps = w2_taps.astype(jnp.bfloat16)

    # depthwise conv: 3x3 taps of per-channel scalars.
    w3_taps = (jnp.transpose(w3[:, 0], (1, 2, 0)) * s3).reshape(9, 1, C2)

    return (w1_taps, b1.reshape(1, C1).astype(jnp.float32),
            w2_taps, b2.reshape(1, C2).astype(jnp.float32),
            w3_taps.astype(jnp.float32), b3.reshape(1, C2).astype(jnp.float32))


@jax.jit
def lite_stem_forward(x_nchw, params):
    x = jnp.transpose(x_nchw, (0, 2, 3, 1))                 # NCHW -> NHWC
    B, H, W, Cin = x.shape
    assert H % 2 == 0 and W % 2 == 0, "even spatial dims expected"
    Ho, Wo = H // 2, W // 2

    # Pad by 1 and space-to-depth by 2 (pure layout plumbing, no im2col blowup).
    xp = jnp.pad(x, ((0, 0), (1, 1), (1, 1), (0, 0)))        # (B, H+2, W+2, Cin)
    x_s2d = xp.reshape(B, Ho + 1, 2, Wo + 1, 2, Cin)
    x_s2d = x_s2d.transpose(0, 1, 3, 2, 4, 5).reshape(B, Ho + 1, Wo + 1, 4 * Cin)

    w1_t, b1, w2_t, b2, w3_t, b3 = _prep_params(params)
    C1, C2 = w1_t.shape[-1], w2_t.shape[-1]

    kernel = functools.partial(_lite_stem_kernel, Ho=Ho, Wo=Wo, C1=C1, C2=C2)
    out = pl.pallas_call(
        kernel,
        out_shape=jax.ShapeDtypeStruct((B, Ho, Wo, C2), x.dtype),
        grid=(B,),
        in_specs=[
            pl.BlockSpec((1, Ho + 1, Wo + 1, 4 * Cin), lambda b: (b, 0, 0, 0)),
            pl.BlockSpec(w1_t.shape, lambda b: (0, 0, 0)),
            pl.BlockSpec(b1.shape, lambda b: (0, 0)),
            pl.BlockSpec(w2_t.shape, lambda b: (0, 0, 0)),
            pl.BlockSpec(b2.shape, lambda b: (0, 0)),
            pl.BlockSpec(w3_t.shape, lambda b: (0, 0, 0)),
            pl.BlockSpec(b3.shape, lambda b: (0, 0)),
        ],
        out_specs=pl.BlockSpec((1, Ho, Wo, C2), lambda b: (b, 0, 0, 0)),
        scratch_shapes=[
            pltpu.VMEM((Ho + 2, Wo + 2, C1), jnp.float32),   # padded conv1 output
            pltpu.VMEM((Ho + 2, Wo + 2, C2), jnp.float32),   # padded conv2 output
        ],
        compiler_params=pltpu.CompilerParams(
            dimension_semantics=("parallel",)),
    )(x_s2d, w1_t, b1, w2_t, b2, w3_t, b3)

    return jnp.transpose(out, (0, 3, 1, 2))                  # NHWC -> NCHW


# ------------------------------ params / reference ----------------------------

def init_params(key, in_channels=3, out_channels=64):
    c1 = out_channels // 2
    ks = jax.random.split(key, 15)

    def conv_w(k, co, ci, kh=3, kw=3):
        fan_in = ci * kh * kw
        return jax.random.normal(k, (co, ci, kh, kw), jnp.float32) * (2.0 / fan_in) ** 0.5

    def bn_p(k4, c):
        kg, kb, km, kv = k4
        return (1.0 + 0.1 * jax.random.normal(kg, (c,), jnp.float32),
                0.1 * jax.random.normal(kb, (c,), jnp.float32),
                0.1 * jax.random.normal(km, (c,), jnp.float32),
                jax.random.uniform(kv, (c,), jnp.float32, minval=0.5, maxval=1.5))

    return {
        "w1": conv_w(ks[0], c1, in_channels),
        "bn1": bn_p(ks[1:5], c1),
        "w2": conv_w(ks[5], out_channels, c1),
        "bn2": bn_p(ks[6:10], out_channels),
        "w3": conv_w(ks[10], out_channels, 1),               # depthwise weight
        "bn3": bn_p(ks[11:15], out_channels),
    }


def lite_stem_reference(x, params, eps=1e-5):
    def conv(x, w, stride, groups=1):
        return jax.lax.conv_general_dilated(
            x, w, window_strides=(stride, stride), padding=((1, 1), (1, 1)),
            dimension_numbers=("NCHW", "OIHW", "NCHW"),
            feature_group_count=groups,
            precision=jax.lax.Precision.HIGHEST)

    def bn_relu(x, bnp):
        gamma, beta, mean, var = bnp
        s = gamma / jnp.sqrt(var + eps)
        b = beta - mean * s
        return jnp.maximum(x * s[None, :, None, None] + b[None, :, None, None], 0.0)

    y = bn_relu(conv(x, params["w1"], 2), params["bn1"])
    y = bn_relu(conv(y, params["w2"], 1), params["bn2"])
    y = bn_relu(conv(y, params["w3"], 1, groups=params["w3"].shape[0]), params["bn3"])
    return y


if __name__ == "__main__":
    key = jax.random.PRNGKey(0)
    kx, kp = jax.random.split(key)

    # LiteStem defaults: in_channels=3, out_channels=64; small spatial input.
    x = jax.random.normal(kx, (2, 3, 16, 16), jnp.float32)
    params = init_params(kp, in_channels=3, out_channels=64)

    out = jax.block_until_ready(lite_stem_forward(x, params))
    assert out.shape == (2, 64, 8, 8), out.shape

    ref = jax.block_until_ready(lite_stem_reference(x, params))
    max_err = float(jnp.max(jnp.abs(out - ref)))
    # Kernel uses the bf16 MXU path (f32 accumulation) vs. a Precision.HIGHEST
    # f32 reference, so a few-percent relative tolerance is expected.
    assert jnp.allclose(out, ref, atol=1e-1, rtol=5e-2), f"max abs err {max_err}"

    print("KERNEL_OK")
</pallas_src>

<mosaic_0001>
module attributes {stable_mosaic.version = 11 : i64} {
  func.func @_lite_stem_kernel(%arg0: i32, %arg1: memref<1x9x9x12xf32, #tpu.memory_space<vmem>>, %arg2: memref<4x12x32xbf16, #tpu.memory_space<vmem>>, %arg3: memref<1x32xf32, #tpu.memory_space<vmem>>, %arg4: memref<9x32x64xbf16, #tpu.memory_space<vmem>>, %arg5: memref<1x64xf32, #tpu.memory_space<vmem>>, %arg6: memref<9x1x64xf32, #tpu.memory_space<vmem>>, %arg7: memref<1x64xf32, #tpu.memory_space<vmem>>, %arg8: memref<1x8x8x64xf32, #tpu.memory_space<vmem>>, %arg9: memref<10x10x32xf32, #tpu.memory_space<vmem>>, %arg10: memref<10x10x64xf32, #tpu.memory_space<vmem>>) attributes {dimension_semantics = [#tpu.dimension_semantics<parallel>], iteration_bounds = array<i64: 2>, scalar_prefetch = 0 : i64, scratch_operands = 2 : i64, tpu.core_type = #tpu.core_type<tc>, window_params = [{transform_indices = @transform_0, window_bounds = array<i64: 1, 9, 9, 12>}, {pipeline_mode = #tpu.pipeline_mode<synchronous>, transform_indices = @transform_1, window_bounds = array<i64: 4, 12, 32>}, {pipeline_mode = #tpu.pipeline_mode<synchronous>, transform_indices = @transform_2, window_bounds = array<i64: 1, 32>}, {pipeline_mode = #tpu.pipeline_mode<synchronous>, transform_indices = @transform_3, window_bounds = array<i64: 9, 32, 64>}, {pipeline_mode = #tpu.pipeline_mode<synchronous>, transform_indices = @transform_4, window_bounds = array<i64: 1, 64>}, {pipeline_mode = #tpu.pipeline_mode<synchronous>, transform_indices = @transform_5, window_bounds = array<i64: 9, 1, 64>}, {pipeline_mode = #tpu.pipeline_mode<synchronous>, transform_indices = @transform_6, window_bounds = array<i64: 1, 64>}, {transform_indices = @transform_7, window_bounds = array<i64: 1, 8, 8, 64>}]} {
    %c0 = arith.constant 0 : index
    %c0_0 = arith.constant 0 : index
    %c0_1 = arith.constant 0 : index
    %c0_2 = arith.constant 0 : index
    %0 = vector.load %arg1[%c0, %c0_0, %c0_1, %c0_2] : memref<1x9x9x12xf32, #tpu.memory_space<vmem>>, vector<1x9x9x12xf32>
    %1 = vector.shape_cast %0 : vector<1x9x9x12xf32> to vector<9x9x12xf32>
    %cst = arith.constant 0.000000e+00 : f32
    %2 = vector.broadcast %cst : f32 to vector<64x32xf32>
    %3 = vector.extract_strided_slice %1 {offsets = [0, 0, 0], sizes = [8, 8, 12], strides = [1, 1, 1]} : vector<9x9x12xf32> to vector<8x8x12xf32>
    %4 = vector.shape_cast %3 : vector<8x8x12xf32> to vector<64x12xf32>
    %5 = arith.truncf %4 : vector<64x12xf32> to vector<64x12xbf16>
    %c0_3 = arith.constant 0 : index
    %c0_4 = arith.constant 0 : index
    %c0_5 = arith.constant 0 : index
    %6 = vector.load %arg2[%c0_3, %c0_4, %c0_5] : memref<4x12x32xbf16, #tpu.memory_space<vmem>>, vector<1x12x32xbf16>
    %7 = vector.shape_cast %6 : vector<1x12x32xbf16> to vector<12x32xbf16>
    %cst_6 = arith.constant dense<0.000000e+00> : vector<64x32xf32>
    %8 = tpu.matmul %5, %7, %cst_6 {dimension_numbers = #tpu.dot_dimension_numbers<[1], [0], [0], [1], [0, 0, 1, 1], [], []>} : vector<64x12xbf16>, vector<12x32xbf16>, vector<64x32xf32> -> vector<64x32xf32>
    %9 = arith.addf %2, %8 : vector<64x32xf32>
    %10 = vector.extract_strided_slice %1 {offsets = [0, 1, 0], sizes = [8, 8, 12], strides = [1, 1, 1]} : vector<9x9x12xf32> to vector<8x8x12xf32>
    %11 = vector.shape_cast %10 : vector<8x8x12xf32> to vector<64x12xf32>
    %12 = arith.truncf %11 : vector<64x12xf32> to vector<64x12xbf16>
    %c1 = arith.constant 1 : index
    %c0_7 = arith.constant 0 : index
    %c0_8 = arith.constant 0 : index
    %13 = vector.load %arg2[%c1, %c0_7, %c0_8] : memref<4x12x32xbf16, #tpu.memory_space<vmem>>, vector<1x12x32xbf16>
    %14 = vector.shape_cast %13 : vector<1x12x32xbf16> to vector<12x32xbf16>
    %cst_9 = arith.constant dense<0.000000e+00> : vector<64x32xf32>
    %15 = tpu.matmul %12, %14, %cst_9 {dimension_numbers = #tpu.dot_dimension_numbers<[1], [0], [0], [1], [0, 0, 1, 1], [], []>} : vector<64x12xbf16>, vector<12x32xbf16>, vector<64x32xf32> -> vector<64x32xf32>
    %16 = arith.addf %9, %15 : vector<64x32xf32>
    %17 = vector.extract_strided_slice %1 {offsets = [1, 0, 0], sizes = [8, 8, 12], strides = [1, 1, 1]} : vector<9x9x12xf32> to vector<8x8x12xf32>
    %18 = vector.shape_cast %17 : vector<8x8x12xf32> to vector<64x12xf32>
    %19 = arith.truncf %18 : vector<64x12xf32> to vector<64x12xbf16>
    %c2 = arith.constant 2 : index
    %c0_10 = arith.constant 0 : index
    %c0_11 = arith.constant 0 : index
    %20 = vector.load %arg2[%c2, %c0_10, %c0_11] : memref<4x12x32xbf16, #tpu.memory_space<vmem>>, vector<1x12x32xbf16>
    %21 = vector.shape_cast %20 : vector<1x12x32xbf16> to vector<12x32xbf16>
    %cst_12 = arith.constant dense<0.000000e+00> : vector<64x32xf32>
    %22 = tpu.matmul %19, %21, %cst_12 {dimension_numbers = #tpu.dot_dimension_numbers<[1], [0], [0], [1], [0, 0, 1, 1], [], []>} : vector<64x12xbf16>, vector<12x32xbf16>, vector<64x32xf32> -> vector<64x32xf32>
    %23 = arith.addf %16, %22 : vector<64x32xf32>
    %24 = vector.extract_strided_slice %1 {offsets = [1, 1, 0], sizes = [8, 8, 12], strides = [1, 1, 1]} : vector<9x9x12xf32> to vector<8x8x12xf32>
    %25 = vector.shape_cast %24 : vector<8x8x12xf32> to vector<64x12xf32>
    %26 = arith.truncf %25 : vector<64x12xf32> to vector<64x12xbf16>
    %c3 = arith.constant 3 : index
    %c0_13 = arith.constant 0 : index
    %c0_14 = arith.constant 0 : index
    %27 = vector.load %arg2[%c3, %c0_13, %c0_14] : memref<4x12x32xbf16, #tpu.memory_space<vmem>>, vector<1x12x32xbf16>
    %28 = vector.shape_cast %27 : vector<1x12x32xbf16> to vector<12x32xbf16>
    %cst_15 = arith.constant dense<0.000000e+00> : vector<64x32xf32>
    %29 = tpu.matmul %26, %28, %cst_15 {dimension_numbers = #tpu.dot_dimension_numbers<[1], [0], [0], [1], [0, 0, 1, 1], [], []>} : vector<64x12xbf16>, vector<12x32xbf16>, vector<64x32xf32> -> vector<64x32xf32>
    %30 = arith.addf %23, %29 : vector<64x32xf32>
    %c0_16 = arith.constant 0 : index
    %c0_17 = arith.constant 0 : index
    %31 = vector.load %arg3[%c0_16, %c0_17] : memref<1x32xf32, #tpu.memory_space<vmem>>, vector<1x32xf32>
    %32 = vector.broadcast %31 : vector<1x32xf32> to vector<64x32xf32>
    %33 = arith.addf %30, %32 : vector<64x32xf32>
    %cst_18 = arith.constant 0.000000e+00 : f32
    %34 = vector.broadcast %cst_18 : f32 to vector<64x32xf32>
    %35 = arith.maximumf %33, %34 : vector<64x32xf32>
    %cst_19 = arith.constant 0.000000e+00 : f32
    %36 = vector.broadcast %cst_19 : f32 to vector<10x10x32xf32>
    %c0_20 = arith.constant 0 : index
    %c0_21 = arith.constant 0 : index
    %c0_22 = arith.constant 0 : index
    %37 = vector.load %arg9[%c0_20, %c0_21, %c0_22] : memref<10x10x32xf32, #tpu.memory_space<vmem>>, vector<10x10x32xf32>
    tpu.vector_store %arg9[%c0_20, %c0_21, %c0_22], %36 {strides = array<i32>} : memref<10x10x32xf32, #tpu.memory_space<vmem>>, vector<10x10x32xf32>,
    %38 = vector.shape_cast %35 : vector<64x32xf32> to vector<8x8x32xf32>
    %c1_23 = arith.constant 1 : index
    %c1_24 = arith.constant 1 : index
    %c0_25 = arith.constant 0 : index
    %39 = vector.load %arg9[%c1_23, %c1_24, %c0_25] : memref<10x10x32xf32, #tpu.memory_space<vmem>>, vector<8x8x32xf32>
    tpu.vector_store %arg9[%c1_23, %c1_24, %c0_25], %38 {strides = array<i32>} : memref<10x10x32xf32, #tpu.memory_space<vmem>>, vector<8x8x32xf32>,
    %cst_26 = arith.constant 0.000000e+00 : f32
    %40 = vector.broadcast %cst_26 : f32 to vector<64x64xf32>
    %c0_27 = arith.constant 0 : index
    %c0_28 = arith.constant 0 : index
    %c0_29 = arith.constant 0 : index
    %41 = vector.load %arg9[%c0_27, %c0_28, %c0_29] : memref<10x10x32xf32, #tpu.memory_space<vmem>>, vector<8x8x32xf32>
    %42 = vector.shape_cast %41 : vector<8x8x32xf32> to vector<64x32xf32>
    %43 = arith.truncf %42 : vector<64x32xf32> to vector<64x32xbf16>
    %c0_30 = arith.constant 0 : index
    %c0_31 = arith.constant 0 : index
    %c0_32 = arith.constant 0 : index
    %44 = vector.load %arg4[%c0_30, %c0_31, %c0_32] : memref<9x32x64xbf16, #tpu.memory_space<vmem>>, vector<1x32x64xbf16>
    %45 = vector.shape_cast %44 : vector<1x32x64xbf16> to vector<32x64xbf16>
    %cst_33 = arith.constant dense<0.000000e+00> : vector<64x64xf32>
    %46 = tpu.matmul %43, %45, %cst_33 {dimension_numbers = #tpu.dot_dimension_numbers<[1], [0], [0], [1], [0, 0, 1, 1], [], []>} : vector<64x32xbf16>, vector<32x64xbf16>, vector<64x64xf32> -> vector<64x64xf32>
    %47 = arith.addf %40, %46 : vector<64x64xf32>
    %c0_34 = arith.constant 0 : index
    %c1_35 = arith.constant 1 : index
    %c0_36 = arith.constant 0 : index
    %48 = vector.load %arg9[%c0_34, %c1_35, %c0_36] : memref<10x10x32xf32, #tpu.memory_space<vmem>>, vector<8x8x32xf32>
    %49 = vector.shape_cast %48 : vector<8x8x32xf32> to vector<64x32xf32>
    %50 = arith.truncf %49 : vector<64x32xf32> to vector<64x32xbf16>
    %c1_37 = arith.constant 1 : index
    %c0_38 = arith.constant 0 : index
    %c0_39 = arith.constant 0 : index
    %51 = vector.load %arg4[%c1_37, %c0_38, %c0_39] : memref<9x32x64xbf16, #tpu.memory_space<vmem>>, vector<1x32x64xbf16>
    %52 = vector.shape_cast %51 : vector<1x32x64xbf16> to vector<32x64xbf16>
    %cst_40 = arith.constant dense<0.000000e+00> : vector<64x64xf32>
    %53 = tpu.matmul %50, %52, %cst_40 {dimension_numbers = #tpu.dot_dimension_numbers<[1], [0], [0], [1], [0, 0, 1, 1], [], []>} : vector<64x32xbf16>, vector<32x64xbf16>, vector<64x64xf32> -> vector<64x64xf32>
    %54 = arith.addf %47, %53 : vector<64x64xf32>
    %c0_41 = arith.constant 0 : index
    %c2_42 = arith.constant 2 : index
    %c0_43 = arith.constant 0 : index
    %55 = vector.load %arg9[%c0_41, %c2_42, %c0_43] : memref<10x10x32xf32, #tpu.memory_space<vmem>>, vector<8x8x32xf32>
    %56 = vector.shape_cast %55 : vector<8x8x32xf32> to vector<64x32xf32>
    %57 = arith.truncf %56 : vector<64x32xf32> to vector<64x32xbf16>
    %c2_44 = arith.constant 2 : index
    %c0_45 = arith.constant 0 : index
    %c0_46 = arith.constant 0 : index
    %58 = vector.load %arg4[%c2_44, %c0_45, %c0_46] : memref<9x32x64xbf16, #tpu.memory_space<vmem>>, vector<1x32x64xbf16>
    %59 = vector.shape_cast %58 : vector<1x32x64xbf16> to vector<32x64xbf16>
    %cst_47 = arith.constant dense<0.000000e+00> : vector<64x64xf32>
    %60 = tpu.matmul %57, %59, %cst_47 {dimension_numbers = #tpu.dot_dimension_numbers<[1], [0], [0], [1], [0, 0, 1, 1], [], []>} : vector<64x32xbf16>, vector<32x64xbf16>, vector<64x64xf32> -> vector<64x64xf32>
    %61 = arith.addf %54, %60 : vector<64x64xf32>
    %c1_48 = arith.constant 1 : index
    %c0_49 = arith.constant 0 : index
    %c0_50 = arith.constant 0 : index
    %62 = vector.load %arg9[%c1_48, %c0_49, %c0_50] : memref<10x10x32xf32, #tpu.memory_space<vmem>>, vector<8x8x32xf32>
    %63 = vector.shape_cast %62 : vector<8x8x32xf32> to vector<64x32xf32>
    %64 = arith.truncf %63 : vector<64x32xf32> to vector<64x32xbf16>
    %c3_51 = arith.constant 3 : index
    %c0_52 = arith.constant 0 : index
    %c0_53 = arith.constant 0 : index
    %65 = vector.load %arg4[%c3_51, %c0_52, %c0_53] : memref<9x32x64xbf16, #tpu.memory_space<vmem>>, vector<1x32x64xbf16>
    %66 = vector.shape_cast %65 : vector<1x32x64xbf16> to vector<32x64xbf16>
    %cst_54 = arith.constant dense<0.000000e+00> : vector<64x64xf32>
    %67 = tpu.matmul %64, %66, %cst_54 {dimension_numbers = #tpu.dot_dimension_numbers<[1], [0], [0], [1], [0, 0, 1, 1], [], []>} : vector<64x32xbf16>, vector<32x64xbf16>, vector<64x64xf32> -> vector<64x64xf32>
    %68 = arith.addf %61, %67 : vector<64x64xf32>
    %c1_55 = arith.constant 1 : index
    %c1_56 = arith.constant 1 : index
    %c0_57 = arith.constant 0 : index
    %69 = vector.load %arg9[%c1_55, %c1_56, %c0_57] : memref<10x10x32xf32, #tpu.memory_space<vmem>>, vector<8x8x32xf32>
    %70 = vector.shape_cast %69 : vector<8x8x32xf32> to vector<64x32xf32>
    %71 = arith.truncf %70 : vector<64x32xf32> to vector<64x32xbf16>
    %c4 = arith.constant 4 : index
    %c0_58 = arith.constant 0 : index
    %c0_59 = arith.constant 0 : index
    %72 = vector.load %arg4[%c4, %c0_58, %c0_59] : memref<9x32x64xbf16, #tpu.memory_space<vmem>>, vector<1x32x64xbf16>
    %73 = vector.shape_cast %72 : vector<1x32x64xbf16> to vector<32x64xbf16>
    %cst_60 = arith.constant dense<0.000000e+00> : vector<64x64xf32>
    %74 = tpu.matmul %71, %73, %cst_60 {dimension_numbers = #tpu.dot_dimension_numbers<[1], [0], [0], [1], [0, 0, 1, 1], [], []>} : vector<64x32xbf16>, vector<32x64xbf16>, vector<64x64xf32> -> vector<64x64xf32>
    %75 = arith.addf %68, %74 : vector<64x64xf32>
    %c1_61 = arith.constant 1 : index
    %c2_62 = arith.constant 2 : index
    %c0_63 = arith.constant 0 : index
    %76 = vector.load %arg9[%c1_61, %c2_62, %c0_63] : memref<10x10x32xf32, #tpu.memory_space<vmem>>, vector<8x8x32xf32>
    %77 = vector.shape_cast %76 : vector<8x8x32xf32> to vector<64x32xf32>
    %78 = arith.truncf %77 : vector<64x32xf32> to vector<64x32xbf16>
    %c5 = arith.constant 5 : index
    %c0_64 = arith.constant 0 : index
    %c0_65 = arith.constant 0 : index
    %79 = vector.load %arg4[%c5, %c0_64, %c0_65] : memref<9x32x64xbf16, #tpu.memory_space<vmem>>, vector<1x32x64xbf16>
    %80 = vector.shape_cast %79 : vector<1x32x64xbf16> to vector<32x64xbf16>
    %cst_66 = arith.constant dense<0.000000e+00> : vector<64x64xf32>
    %81 = tpu.matmul %78, %80, %cst_66 {dimension_numbers = #tpu.dot_dimension_numbers<[1], [0], [0], [1], [0, 0, 1, 1], [], []>} : vector<64x32xbf16>, vector<32x64xbf16>, vector<64x64xf32> -> vector<64x64xf32>
    %82 = arith.addf %75, %81 : vector<64x64xf32>
    %c2_67 = arith.constant 2 : index
    %c0_68 = arith.constant 0 : index
    %c0_69 = arith.constant 0 : index
    %83 = vector.load %arg9[%c2_67, %c0_68, %c0_69] : memref<10x10x32xf32, #tpu.memory_space<vmem>>, vector<8x8x32xf32>
    %84 = vector.shape_cast %83 : vector<8x8x32xf32> to vector<64x32xf32>
    %85 = arith.truncf %84 : vector<64x32xf32> to vector<64x32xbf16>
    %c6 = arith.constant 6 : index
    %c0_70 = arith.constant 0 : index
    %c0_71 = arith.constant 0 : index
    %86 = vector.load %arg4[%c6, %c0_70, %c0_71] : memref<9x32x64xbf16, #tpu.memory_space<vmem>>, vector<1x32x64xbf16>
    %87 = vector.shape_cast %86 : vector<1x32x64xbf16> to vector<32x64xbf16>
    %cst_72 = arith.constant dense<0.000000e+00> : vector<64x64xf32>
    %88 = tpu.matmul %85, %87, %cst_72 {dimension_numbers = #tpu.dot_dimension_numbers<[1], [0], [0], [1], [0, 0, 1, 1], [], []>} : vector<64x32xbf16>, vector<32x64xbf16>, vector<64x64xf32> -> vector<64x64xf32>
    %89 = arith.addf %82, %88 : vector<64x64xf32>
    %c2_73 = arith.constant 2 : index
    %c1_74 = arith.constant 1 : index
    %c0_75 = arith.constant 0 : index
    %90 = vector.load %arg9[%c2_73, %c1_74, %c0_75] : memref<10x10x32xf32, #tpu.memory_space<vmem>>, vector<8x8x32xf32>
    %91 = vector.shape_cast %90 : vector<8x8x32xf32> to vector<64x32xf32>
    %92 = arith.truncf %91 : vector<64x32xf32> to vector<64x32xbf16>
    %c7 = arith.constant 7 : index
    %c0_76 = arith.constant 0 : index
    %c0_77 = arith.constant 0 : index
    %93 = vector.load %arg4[%c7, %c0_76, %c0_77] : memref<9x32x64xbf16, #tpu.memory_space<vmem>>, vector<1x32x64xbf16>
    %94 = vector.shape_cast %93 : vector<1x32x64xbf16> to vector<32x64xbf16>
    %cst_78 = arith.constant dense<0.000000e+00> : vector<64x64xf32>
    %95 = tpu.matmul %92, %94, %cst_78 {dimension_numbers = #tpu.dot_dimension_numbers<[1], [0], [0], [1], [0, 0, 1, 1], [], []>} : vector<64x32xbf16>, vector<32x64xbf16>, vector<64x64xf32> -> vector<64x64xf32>
    %96 = arith.addf %89, %95 : vector<64x64xf32>
    %c2_79 = arith.constant 2 : index
    %c2_80 = arith.constant 2 : index
    %c0_81 = arith.constant 0 : index
    %97 = vector.load %arg9[%c2_79, %c2_80, %c0_81] : memref<10x10x32xf32, #tpu.memory_space<vmem>>, vector<8x8x32xf32>
    %98 = vector.shape_cast %97 : vector<8x8x32xf32> to vector<64x32xf32>
    %99 = arith.truncf %98 : vector<64x32xf32> to vector<64x32xbf16>
    %c8 = arith.constant 8 : index
    %c0_82 = arith.constant 0 : index
    %c0_83 = arith.constant 0 : index
    %100 = vector.load %arg4[%c8, %c0_82, %c0_83] : memref<9x32x64xbf16, #tpu.memory_space<vmem>>, vector<1x32x64xbf16>
    %101 = vector.shape_cast %100 : vector<1x32x64xbf16> to vector<32x64xbf16>
    %cst_84 = arith.constant dense<0.000000e+00> : vector<64x64xf32>
    %102 = tpu.matmul %99, %101, %cst_84 {dimension_numbers = #tpu.dot_dimension_numbers<[1], [0], [0], [1], [0, 0, 1, 1], [], []>} : vector<64x32xbf16>, vector<32x64xbf16>, vector<64x64xf32> -> vector<64x64xf32>
    %103 = arith.addf %96, %102 : vector<64x64xf32>
    %c0_85 = arith.constant 0 : index
    %c0_86 = arith.constant 0 : index
    %104 = vector.load %arg5[%c0_85, %c0_86] : memref<1x64xf32, #tpu.memory_space<vmem>>, vector<1x64xf32>
    %105 = vector.broadcast %104 : vector<1x64xf32> to vector<64x64xf32>
    %106 = arith.addf %103, %105 : vector<64x64xf32>
    %cst_87 = arith.constant 0.000000e+00 : f32
    %107 = vector.broadcast %cst_87 : f32 to vector<64x64xf32>
    %108 = arith.maximumf %106, %107 : vector<64x64xf32>
    %cst_88 = arith.constant 0.000000e+00 : f32
    %109 = vector.broadcast %cst_88 : f32 to vector<10x10x64xf32>
    %c0_89 = arith.constant 0 : index
    %c0_90 = arith.constant 0 : index
    %c0_91 = arith.constant 0 : index
    %110 = vector.load %arg10[%c0_89, %c0_90, %c0_91] : memref<10x10x64xf32, #tpu.memory_space<vmem>>, vector<10x10x64xf32>
    tpu.vector_store %arg10[%c0_89, %c0_90, %c0_91], %109 {strides = array<i32>} : memref<10x10x64xf32, #tpu.memory_space<vmem>>, vector<10x10x64xf32>,
    %111 = vector.shape_cast %108 : vector<64x64xf32> to vector<8x8x64xf32>
    %c1_92 = arith.constant 1 : index
    %c1_93 = arith.constant 1 : index
    %c0_94 = arith.constant 0 : index
    %112 = vector.load %arg10[%c1_92, %c1_93, %c0_94] : memref<10x10x64xf32, #tpu.memory_space<vmem>>, vector<8x8x64xf32>
    tpu.vector_store %arg10[%c1_92, %c1_93, %c0_94], %111 {strides = array<i32>} : memref<10x10x64xf32, #tpu.memory_space<vmem>>, vector<8x8x64xf32>,
    %cst_95 = arith.constant 0.000000e+00 : f32
    %113 = vector.broadcast %cst_95 : f32 to vector<8x8x64xf32>
    %c0_96 = arith.constant 0 : index
    %c0_97 = arith.constant 0 : index
    %c0_98 = arith.constant 0 : index
    %114 = vector.load %arg10[%c0_96, %c0_97, %c0_98] : memref<10x10x64xf32, #tpu.memory_space<vmem>>, vector<8x8x64xf32>
    %c0_99 = arith.constant 0 : index
    %c0_100 = arith.constant 0 : index
    %c0_101 = arith.constant 0 : index
    %115 = vector.load %arg6[%c0_99, %c0_100, %c0_101] : memref<9x1x64xf32, #tpu.memory_space<vmem>>, vector<1x1x64xf32>
    %116 = vector.shape_cast %115 : vector<1x1x64xf32> to vector<1x64xf32>
    %117 = vector.shape_cast %116 : vector<1x64xf32> to vector<1x1x64xf32>
    %118 = vector.broadcast %117 : vector<1x1x64xf32> to vector<8x8x64xf32>
    %119 = arith.mulf %114, %118 : vector<8x8x64xf32>
    %120 = arith.addf %113, %119 : vector<8x8x64xf32>
    %c0_102 = arith.constant 0 : index
    %c1_103 = arith.constant 1 : index
    %c0_104 = arith.constant 0 : index
    %121 = vector.load %arg10[%c0_102, %c1_103, %c0_104] : memref<10x10x64xf32, #tpu.memory_space<vmem>>, vector<8x8x64xf32>
    %c1_105 = arith.constant 1 : index
    %c0_106 = arith.constant 0 : index
    %c0_107 = arith.constant 0 : index
    %122 = vector.load %arg6[%c1_105, %c0_106, %c0_107] : memref<9x1x64xf32, #tpu.memory_space<vmem>>, vector<1x1x64xf32>
    %123 = vector.shape_cast %122 : vector<1x1x64xf32> to vector<1x64xf32>
    %124 = vector.shape_cast %123 : vector<1x64xf32> to vector<1x1x64xf32>
    %125 = vector.broadcast %124 : vector<1x1x64xf32> to vector<8x8x64xf32>
    %126 = arith.mulf %121, %125 : vector<8x8x64xf32>
    %127 = arith.addf %120, %126 : vector<8x8x64xf32>
    %c0_108 = arith.constant 0 : index
    %c2_109 = arith.constant 2 : index
    %c0_110 = arith.constant 0 : index
    %128 = vector.load %arg10[%c0_108, %c2_109, %c0_110] : memref<10x10x64xf32, #tpu.memory_space<vmem>>, vector<8x8x64xf32>
    %c2_111 = arith.constant 2 : index
    %c0_112 = arith.constant 0 : index
    %c0_113 = arith.constant 0 : index
    %129 = vector.load %arg6[%c2_111, %c0_112, %c0_113] : memref<9x1x64xf32, #tpu.memory_space<vmem>>, vector<1x1x64xf32>
    %130 = vector.shape_cast %129 : vector<1x1x64xf32> to vector<1x64xf32>
    %131 = vector.shape_cast %130 : vector<1x64xf32> to vector<1x1x64xf32>
    %132 = vector.broadcast %131 : vector<1x1x64xf32> to vector<8x8x64xf32>
    %133 = arith.mulf %128, %132 : vector<8x8x64xf32>
    %134 = arith.addf %127, %133 : vector<8x8x64xf32>
    %c1_114 = arith.constant 1 : index
    %c0_115 = arith.constant 0 : index
    %c0_116 = arith.constant 0 : index
    %135 = vector.load %arg10[%c1_114, %c0_115, %c0_116] : memref<10x10x64xf32, #tpu.memory_space<vmem>>, vector<8x8x64xf32>
    %c3_117 = arith.constant 3 : index
    %c0_118 = arith.constant 0 : index
    %c0_119 = arith.constant 0 : index
    %136 = vector.load %arg6[%c3_117, %c0_118, %c0_119] : memref<9x1x64xf32, #tpu.memory_space<vmem>>, vector<1x1x64xf32>
    %137 = vector.shape_cast %136 : vector<1x1x64xf32> to vector<1x64xf32>
    %138 = vector.shape_cast %137 : vector<1x64xf32> to vector<1x1x64xf32>
    %139 = vector.broadcast %138 : vector<1x1x64xf32> to vector<8x8x64xf32>
    %140 = arith.mulf %135, %139 : vector<8x8x64xf32>
    %141 = arith.addf %134, %140 : vector<8x8x64xf32>
    %c1_120 = arith.constant 1 : index
    %c1_121 = arith.constant 1 : index
    %c0_122 = arith.constant 0 : index
    %142 = vector.load %arg10[%c1_120, %c1_121, %c0_122] : memref<10x10x64xf32, #tpu.memory_space<vmem>>, vector<8x8x64xf32>
    %c4_123 = arith.constant 4 : index
    %c0_124 = arith.constant 0 : index
    %c0_125 = arith.constant 0 : index
    %143 = vector.load %arg6[%c4_123, %c0_124, %c0_125] : memref<9x1x64xf32, #tpu.memory_space<vmem>>, vector<1x1x64xf32>
    %144 = vector.shape_cast %143 : vector<1x1x64xf32> to vector<1x64xf32>
    %145 = vector.shape_cast %144 : vector<1x64xf32> to vector<1x1x64xf32>
    %146 = vector.broadcast %145 : vector<1x1x64xf32> to vector<8x8x64xf32>
    %147 = arith.mulf %142, %146 : vector<8x8x64xf32>
    %148 = arith.addf %141, %147 : vector<8x8x64xf32>
    %c1_126 = arith.constant 1 : index
    %c2_127 = arith.constant 2 : index
    %c0_128 = arith.constant 0 : index
    %149 = vector.load %arg10[%c1_126, %c2_127, %c0_128] : memref<10x10x64xf32, #tpu.memory_space<vmem>>, vector<8x8x64xf32>
    %c5_129 = arith.constant 5 : index
    %c0_130 = arith.constant 0 : index
    %c0_131 = arith.constant 0 : index
    %150 = vector.load %arg6[%c5_129, %c0_130, %c0_131] : memref<9x1x64xf32, #tpu.memory_space<vmem>>, vector<1x1x64xf32>
    %151 = vector.shape_cast %150 : vector<1x1x64xf32> to vector<1x64xf32>
    %152 = vector.shape_cast %151 : vector<1x64xf32> to vector<1x1x64xf32>
    %153 = vector.broadcast %152 : vector<1x1x64xf32> to vector<8x8x64xf32>
    %154 = arith.mulf %149, %153 : vector<8x8x64xf32>
    %155 = arith.addf %148, %154 : vector<8x8x64xf32>
    %c2_132 = arith.constant 2 : index
    %c0_133 = arith.constant 0 : index
    %c0_134 = arith.constant 0 : index
    %156 = vector.load %arg10[%c2_132, %c0_133, %c0_134] : memref<10x10x64xf32, #tpu.memory_space<vmem>>, vector<8x8x64xf32>
    %c6_135 = arith.constant 6 : index
    %c0_136 = arith.constant 0 : index
    %c0_137 = arith.constant 0 : index
    %157 = vector.load %arg6[%c6_135, %c0_136, %c0_137] : memref<9x1x64xf32, #tpu.memory_space<vmem>>, vector<1x1x64xf32>
    %158 = vector.shape_cast %157 : vector<1x1x64xf32> to vector<1x64xf32>
    %159 = vector.shape_cast %158 : vector<1x64xf32> to vector<1x1x64xf32>
    %160 = vector.broadcast %159 : vector<1x1x64xf32> to vector<8x8x64xf32>
    %161 = arith.mulf %156, %160 : vector<8x8x64xf32>
    %162 = arith.addf %155, %161 : vector<8x8x64xf32>
    %c2_138 = arith.constant 2 : index
    %c1_139 = arith.constant 1 : index
    %c0_140 = arith.constant 0 : index
    %163 = vector.load %arg10[%c2_138, %c1_139, %c0_140] : memref<10x10x64xf32, #tpu.memory_space<vmem>>, vector<8x8x64xf32>
    %c7_141 = arith.constant 7 : index
    %c0_142 = arith.constant 0 : index
    %c0_143 = arith.constant 0 : index
    %164 = vector.load %arg6[%c7_141, %c0_142, %c0_143] : memref<9x1x64xf32, #tpu.memory_space<vmem>>, vector<1x1x64xf32>
    %165 = vector.shape_cast %164 : vector<1x1x64xf32> to vector<1x64xf32>
    %166 = vector.shape_cast %165 : vector<1x64xf32> to vector<1x1x64xf32>
    %167 = vector.broadcast %166 : vector<1x1x64xf32> to vector<8x8x64xf32>
    %168 = arith.mulf %163, %167 : vector<8x8x64xf32>
    %169 = arith.addf %162, %168 : vector<8x8x64xf32>
    %c2_144 = arith.constant 2 : index
    %c2_145 = arith.constant 2 : index
    %c0_146 = arith.constant 0 : index
    %170 = vector.load %arg10[%c2_144, %c2_145, %c0_146] : memref<10x10x64xf32, #tpu.memory_space<vmem>>, vector<8x8x64xf32>
    %c8_147 = arith.constant 8 : index
    %c0_148 = arith.constant 0 : index
    %c0_149 = arith.constant 0 : index
    %171 = vector.load %arg6[%c8_147, %c0_148, %c0_149] : memref<9x1x64xf32, #tpu.memory_space<vmem>>, vector<1x1x64xf32>
    %172 = vector.shape_cast %171 : vector<1x1x64xf32> to vector<1x64xf32>
    %173 = vector.shape_cast %172 : vector<1x64xf32> to vector<1x1x64xf32>
    %174 = vector.broadcast %173 : vector<1x1x64xf32> to vector<8x8x64xf32>
    %175 = arith.mulf %170, %174 : vector<8x8x64xf32>
    %176 = arith.addf %169, %175 : vector<8x8x64xf32>
    %c0_150 = arith.constant 0 : index
    %c0_151 = arith.constant 0 : index
    %177 = vector.load %arg7[%c0_150, %c0_151] : memref<1x64xf32, #tpu.memory_space<vmem>>, vector<1x64xf32>
    %178 = vector.shape_cast %177 : vector<1x64xf32> to vector<1x1x64xf32>
    %179 = vector.broadcast %178 : vector<1x1x64xf32> to vector<8x8x64xf32>
    %180 = arith.addf %176, %179 : vector<8x8x64xf32>
    %cst_152 = arith.constant 0.000000e+00 : f32
    %181 = vector.broadcast %cst_152 : f32 to vector<8x8x64xf32>
    %182 = arith.maximumf %180, %181 : vector<8x8x64xf32>
    %183 = vector.shape_cast %182 : vector<8x8x64xf32> to vector<1x8x8x64xf32>
    %c0_153 = arith.constant 0 : index
    %c0_154 = arith.constant 0 : index
    %c0_155 = arith.constant 0 : index
    %c0_156 = arith.constant 0 : index
    %184 = vector.load %arg8[%c0_153, %c0_154, %c0_155, %c0_156] : memref<1x8x8x64xf32, #tpu.memory_space<vmem>>, vector<1x8x8x64xf32>
    tpu.vector_store %arg8[%c0_153, %c0_154, %c0_155, %c0_156], %183 {strides = array<i32>} : memref<1x8x8x64xf32, #tpu.memory_space<vmem>>, vector<1x8x8x64xf32>,
    return
  }
  func.func @transform_0(%arg0: i32) -> (i32, i32, i32, i32) {
    %c0_i32 = arith.constant 0 : i32
    %c0_i32_0 = arith.constant 0 : i32
    %c0_i32_1 = arith.constant 0 : i32
    %c0_i32_2 = arith.constant 0 : i32
    return %arg0, %c0_i32, %c0_i32_0, %c0_i32_1 : i32, i32, i32, i32
  }
  func.func @transform_1(%arg0: i32) -> (i32, i32, i32) {
    %c0_i32 = arith.constant 0 : i32
    %c0_i32_0 = arith.constant 0 : i32
    %c0_i32_1 = arith.constant 0 : i32
    %c0_i32_2 = arith.constant 0 : i32
    return %c0_i32, %c0_i32_0, %c0_i32_1 : i32, i32, i32
  }
  func.func @transform_2(%arg0: i32) -> (i32, i32) {
    %c0_i32 = arith.constant 0 : i32
    %c0_i32_0 = arith.constant 0 : i32
    %c0_i32_1 = arith.constant 0 : i32
    return %c0_i32, %c0_i32_0 : i32, i32
  }
  func.func @transform_3(%arg0: i32) -> (i32, i32, i32) {
    %c0_i32 = arith.constant 0 : i32
    %c0_i32_0 = arith.constant 0 : i32
    %c0_i32_1 = arith.constant 0 : i32
    %c0_i32_2 = arith.constant 0 : i32
    return %c0_i32, %c0_i32_0, %c0_i32_1 : i32, i32, i32
  }
  func.func @transform_4(%arg0: i32) -> (i32, i32) {
    %c0_i32 = arith.constant 0 : i32
    %c0_i32_0 = arith.constant 0 : i32
    %c0_i32_1 = arith.constant 0 : i32
    return %c0_i32, %c0_i32_0 : i32, i32
  }
  func.func @transform_5(%arg0: i32) -> (i32, i32, i32) {
    %c0_i32 = arith.constant 0 : i32
    %c0_i32_0 = arith.constant 0 : i32
    %c0_i32_1 = arith.constant 0 : i32
    %c0_i32_2 = arith.constant 0 : i32
    return %c0_i32, %c0_i32_0, %c0_i32_1 : i32, i32, i32
  }
  func.func @transform_6(%arg0: i32) -> (i32, i32) {
    %c0_i32 = arith.constant 0 : i32
    %c0_i32_0 = arith.constant 0 : i32
    %c0_i32_1 = arith.constant 0 : i32
    return %c0_i32, %c0_i32_0 : i32, i32
  }
  func.func @transform_7(%arg0: i32) -> (i32, i32, i32, i32) {
    %c0_i32 = arith.constant 0 : i32
    %c0_i32_0 = arith.constant 0 : i32
    %c0_i32_1 = arith.constant 0 : i32
    %c0_i32_2 = arith.constant 0 : i32
    return %arg0, %c0_i32, %c0_i32_0, %c0_i32_1 : i32, i32, i32, i32
  }
}

</mosaic_0001>

<llo_original>
// kernel: lite_stem_forward.1
$region0: #{lite_stem_forward.1}
  #allocation0 [shape = 'u32[]', space=smem, size = 0x4, offset = 0x4, fixed_abs, tag = 'smem constant byte address 0x4 - core index']
  #allocation1 [shape = 'u32[144,128]{1,0:T(1,128)}', space=vmem, size = 0x12000, scoped, tag = 'internal scratch']
  #allocation2 [shape = 'f32[10,10,32]{2,1,0:T(8,128)}', space=vmem, size = 0x14000, scoped, tag = 'scratch operand']
  #allocation3 [shape = 'f32[10,10,64]{2,1,0:T(8,128)}', space=vmem, size = 0x14000, scoped, tag = 'scratch operand']
  %s0 = inlined_call_operand.vmem [shape: f32[2,9,9,12], index: 0, kind: input, shape index: {}]
  %s1 = inlined_call_operand.vmem [shape: bf16[4,12,32], index: 1, kind: input, shape index: {}]
  %s2 = inlined_call_operand.vmem [shape: f32[1,32], index: 2, kind: input, shape index: {}]
  %s3 = inlined_call_operand.vmem [shape: bf16[9,32,64], index: 3, kind: input, shape index: {}]
  %s4 = inlined_call_operand.vmem [shape: f32[1,64], index: 4, kind: input, shape index: {}]
  %s5 = inlined_call_operand.vmem [shape: f32[9,1,64], index: 5, kind: input, shape index: {}]
  %s6 = inlined_call_operand.vmem [shape: f32[1,64], index: 6, kind: input, shape index: {}]
  %s7 = inlined_call_operand.hbm [shape: f32[2,8,8,64], index: 7, kind: output, shape index: {}]
  %s8 = sld [smem:[#allocation0]]
  $region61: #{lite_stem_forward.1} parent=0
    _
  %s10 = ssub.s32 1, %s8
  %s11 = scalar_select 0, %s10, %s8
  $region1: #{lite_stem_forward.1} parent=0
    #allocation4 [shape = 'u8[65536]{0}', space=vmem, size = 0x10000, scoped, tag = 'output window, operand 0']
    #allocation5 [shape = 's32[2]{0}', space=sflag, size = 0x8, scoped, tag = 'scoped memory for lite_stem_forward.1']
    %12 = vsyncpa [#allocation5], 0
    %s13 = scalar_lea.sflag [#allocation5], 1
    %14 = vsyncpa %s13, 0
    loop: start=0, step=1, limit=4
    $region2: #{lite_stem_forward.1} parent=1 // loop_pre_header
      _
    $region3: #{lite_stem_forward.1} parent=1 // loop_header
      %s16 = sphi 0, %s20
      %p17 = scmp.ge.s32.totalorder %s16, 4
      %s26 = sphi 0, %s28
      %s29 = sphi 0, %s26
      %s30 = sphi 0, %s29
      %s46 = sphi 0, %s30
      %s50 = sphi 0, %s50
      %s52 = sphi 0, %s50
      %s53 = sphi 0, %s52
      %s67 = sphi 0, %s53
      %s71 = sphi 0, %s71
      %s73 = sphi 0, %s71
      %s74 = sphi 0, %s73
      %s88 = sphi 0, %s74
      %s92 = sphi 0, %s92
      %s94 = sphi 0, %s92
      %s95 = sphi 0, %s94
      %s109 = sphi 0, %s95
      %s113 = sphi 0, %s113
      %s115 = sphi 0, %s113
      %s116 = sphi 0, %s115
      %s130 = sphi 0, %s116
      %s134 = sphi 0, %s134
      %s136 = sphi 0, %s134
      %s137 = sphi 0, %s136
      %s151 = sphi 0, %s137
      %s155 = sphi 0, %s155
      %s157 = sphi 0, %s155
      %s158 = sphi 0, %s157
      %s172 = sphi 0, %s158
      %s178 = sphi 0, %s180
      %s181 = sphi 0, %s178
      %s182 = sphi 0, %s181
      %s198 = sphi 0, %s182
    $region4: #{lite_stem_forward.1} parent=1 // loop_header_branch
      %19 = sbr.rel (%p17) target = $region8
    $region5: #{lite_stem_forward.1} parent=1 // loop_body
      %s21 = ssub.s32 %s16, 1
      %s22 = ssub.s32 %s16, 2
      %s23 = sadd.s32 %s16, 1
      %s24 = ssub.s32 %s16, %s23
      %p25 = scmp.eq.s32.totalorder %s24, 0
      %s27 = sadd.s32 %s26, 1
      %s28 = scalar_select %p25, %s26, %s27
      %p31 = pneg %p25
      %p32 = scmp.eq.s32.totalorder %s16, 1
      %p33 = por %p31, %p32
      %p34 = scmp.ne.s32.totalorder %s26, %s29
      %p35 = scmp.eq.s32.totalorder %s16, 0
      %p36 = por %p34, %p35
      %p37 = scmp.ne.s32.totalorder %s26, %s29
      %p38 = scmp.eq.s32.totalorder %s21, 1
      %p39 = por %p37, %p38
      %p40 = scmp.ne.s32.totalorder %s29, %s30
      %p41 = scmp.eq.s32.totalorder %s21, 0
      %p42 = por %p40, %p41
      %p43 = scmp.ne.s32.totalorder %s29, %s30
      %p44 = scmp.eq.s32.totalorder %s22, 1
      %p45 = por %p43, %p44
      %p47 = scmp.ne.s32.totalorder %s30, %s46
      %p48 = scmp.eq.s32.totalorder %s22, 0
      %p49 = por %p47, %p48
      %s51 = sadd.s32 %s50, 1
      %p54 = scmp.eq.s32.totalorder %s16, 1
      %p55 = scmp.ne.s32.totalorder %s50, %s52
      %p56 = scmp.eq.s32.totalorder %s16, 0
      %p57 = por %p55, %p56
      %p58 = scmp.ne.s32.totalorder %s50, %s52
      %p59 = scmp.eq.s32.totalorder %s21, 1
      %p60 = por %p58, %p59
      %p61 = scmp.ne.s32.totalorder %s52, %s53
      %p62 = scmp.eq.s32.totalorder %s21, 0
      %p63 = por %p61, %p62
      %p64 = scmp.ne.s32.totalorder %s52, %s53
      %p65 = scmp.eq.s32.totalorder %s22, 1
      %p66 = por %p64, %p65
      %p68 = scmp.ne.s32.totalorder %s53, %s67
      %p69 = scmp.eq.s32.totalorder %s22, 0
      %p70 = por %p68, %p69
      %s72 = sadd.s32 %s71, 1
      %p75 = scmp.eq.s32.totalorder %s16, 1
      %p76 = scmp.ne.s32.totalorder %s71, %s73
      %p77 = scmp.eq.s32.totalorder %s16, 0
      %p78 = por %p76, %p77
      %p79 = scmp.ne.s32.totalorder %s71, %s73
      %p80 = scmp.eq.s32.totalorder %s21, 1
      %p81 = por %p79, %p80
      %p82 = scmp.ne.s32.totalorder %s73, %s74
      %p83 = scmp.eq.s32.totalorder %s21, 0
      %p84 = por %p82, %p83
      %p85 = scmp.ne.s32.totalorder %s73, %s74
      %p86 = scmp.eq.s32.totalorder %s22, 1
      %p87 = por %p85, %p86
      %p89 = scmp.ne.s32.totalorder %s74, %s88
      %p90 = scmp.eq.s32.totalorder %s22, 0
      %p91 = por %p89, %p90
      %s93 = sadd.s32 %s92, 1
      %p96 = scmp.eq.s32.totalorder %s16, 1
      %p97 = scmp.ne.s32.totalorder %s92, %s94
      %p98 = scmp.eq.s32.totalorder %s16, 0
      %p99 = por %p97, %p98
      %p100 = scmp.ne.s32.totalorder %s92, %s94
      %p101 = scmp.eq.s32.totalorder %s21, 1
      %p102 = por %p100, %p101
      %p103 = scmp.ne.s32.totalorder %s94, %s95
      %p104 = scmp.eq.s32.totalorder %s21, 0
      %p105 = por %p103, %p104
      %p106 = scmp.ne.s32.totalorder %s94, %s95
      %p107 = scmp.eq.s32.totalorder %s22, 1
      %p108 = por %p106, %p107
      %p110 = scmp.ne.s32.totalorder %s95, %s109
      %p111 = scmp.eq.s32.totalorder %s22, 0
      %p112 = por %p110, %p111
      %s114 = sadd.s32 %s113, 1
      %p117 = scmp.eq.s32.totalorder %s16, 1
      %p118 = scmp.ne.s32.totalorder %s113, %s115
      %p119 = scmp.eq.s32.totalorder %s16, 0
      %p120 = por %p118, %p119
      %p121 = scmp.ne.s32.totalorder %s113, %s115
      %p122 = scmp.eq.s32.totalorder %s21, 1
      %p123 = por %p121, %p122
      %p124 = scmp.ne.s32.totalorder %s115, %s116
      %p125 = scmp.eq.s32.totalorder %s21, 0
      %p126 = por %p124, %p125
      %p127 = scmp.ne.s32.totalorder %s115, %s116
      %p128 = scmp.eq.s32.totalorder %s22, 1
      %p129 = por %p127, %p128
      %p131 = scmp.ne.s32.totalorder %s116, %s130
      %p132 = scmp.eq.s32.totalorder %s22, 0
      %p133 = por %p131, %p132
      %s135 = sadd.s32 %s134, 1
      %p138 = scmp.eq.s32.totalorder %s16, 1
      %p139 = scmp.ne.s32.totalorder %s134, %s136
      %p140 = scmp.eq.s32.totalorder %s16, 0
      %p141 = por %p139, %p140
      %p142 = scmp.ne.s32.totalorder %s134, %s136
      %p143 = scmp.eq.s32.totalorder %s21, 1
      %p144 = por %p142, %p143
      %p145 = scmp.ne.s32.totalorder %s136, %s137
      %p146 = scmp.eq.s32.totalorder %s21, 0
      %p147 = por %p145, %p146
      %p148 = scmp.ne.s32.totalorder %s136, %s137
      %p149 = scmp.eq.s32.totalorder %s22, 1
      %p150 = por %p148, %p149
      %p152 = scmp.ne.s32.totalorder %s137, %s151
      %p153 = scmp.eq.s32.totalorder %s22, 0
      %p154 = por %p152, %p153
      %s156 = sadd.s32 %s155, 1
      %p159 = scmp.eq.s32.totalorder %s16, 1
      %p160 = scmp.ne.s32.totalorder %s155, %s157
      %p161 = scmp.eq.s32.totalorder %s16, 0
      %p162 = por %p160, %p161
      %p163 = scmp.ne.s32.totalorder %s155, %s157
      %p164 = scmp.eq.s32.totalorder %s21, 1
      %p165 = por %p163, %p164
      %p166 = scmp.ne.s32.totalorder %s157, %s158
      %p167 = scmp.eq.s32.totalorder %s21, 0
      %p168 = por %p166, %p167
      %p169 = scmp.ne.s32.totalorder %s157, %s158
      %p170 = scmp.eq.s32.totalorder %s22, 1
      %p171 = por %p169, %p170
      %p173 = scmp.ne.s32.totalorder %s158, %s172
      %p174 = scmp.eq.s32.totalorder %s22, 0
      %p175 = por %p173, %p174
      %s176 = ssub.s32 %s16, %s23
      %p177 = scmp.eq.s32.totalorder %s176, 0
      %s179 = sadd.s32 %s178, 1
      %s180 = scalar_select %p177, %s178, %s179
      %p183 = pneg %p177
      %p184 = scmp.eq.s32.totalorder %s16, 1
      %p185 = por %p183, %p184
      %p186 = scmp.ne.s32.totalorder %s178, %s181
      %p187 = scmp.eq.s32.totalorder %s16, 0
      %p188 = por %p186, %p187
      %p189 = scmp.ne.s32.totalorder %s178, %s181
      %p190 = scmp.eq.s32.totalorder %s21, 1
      %p191 = por %p189, %p190
      %p192 = scmp.ne.s32.totalorder %s181, %s182
      %p193 = scmp.eq.s32.totalorder %s21, 0
      %p194 = por %p192, %p193
      %p195 = scmp.ne.s32.totalorder %s181, %s182
      %p196 = scmp.eq.s32.totalorder %s22, 1
      %p197 = por %p195, %p196
      %p199 = scmp.ne.s32.totalorder %s182, %s198
      %p200 = scmp.eq.s32.totalorder %s22, 0
      %p201 = por %p199, %p200
      %p202 = scmp.le.s32.totalorder 1, %s16
      %p203 = scmp.lt.s32.totalorder %s16, 3
      %p204 = pnand %p202, %p203
      %p205 = pneg %p204
      // Predicated region
      $region9: #{lite_stem_forward.1} parent=5 // pred_check
        _
      $region10: #{lite_stem_forward.1} parent=5 // pred_check_branch
        %207 = sbr.rel (%p204) target = $region12
      $region11: #{lite_stem_forward.1} parent=5 // pred_region
        %s208 = ssub.s32 %s16, 1
        // Predicated region
        $region13: #{lite_stem_forward.1} parent=11 // pred_check
          %p209 = pneg %p63
        $region14: #{lite_stem_forward.1} parent=11 // pred_check_branch
          %211 = sbr.rel (%p209) target = $region16
        $region15: #{lite_stem_forward.1} parent=11 // pred_region
          _
        $region16: #{lite_stem_forward.1} parent=11 // pred_fallthru
          _
        // Predicated region
        $region17: #{lite_stem_forward.1} parent=11 // pred_check
          %p212 = pneg %p84
        $region18: #{lite_stem_forward.1} parent=11 // pred_check_branch
          %214 = sbr.rel (%p212) target = $region20
        $region19: #{lite_stem_forward.1} parent=11 // pred_region
          _
        $region20: #{lite_stem_forward.1} parent=11 // pred_fallthru
          _
        // Predicated region
        $region21: #{lite_stem_forward.1} parent=11 // pred_check
          %p215 = pneg %p105
        $region22: #{lite_stem_forward.1} parent=11 // pred_check_branch
          %217 = sbr.rel (%p215) target = $region24
        $region23: #{lite_stem_forward.1} parent=11 // pred_region
          _
        $region24: #{lite_stem_forward.1} parent=11 // pred_fallthru
          _
        // Predicated region
        $region25: #{lite_stem_forward.1} parent=11 // pred_check
          %p218 = pneg %p126
        $region26: #{lite_stem_forward.1} parent=11 // pred_check_branch
          %220 = sbr.rel (%p218) target = $region28
        $region27: #{lite_stem_forward.1} parent=11 // pred_region
          _
        $region28: #{lite_stem_forward.1} parent=11 // pred_fallthru
          _
        // Predicated region
        $region29: #{lite_stem_forward.1} parent=11 // pred_check
          %p221 = pneg %p147
        $region30: #{lite_stem_forward.1} parent=11 // pred_check_branch
          %223 = sbr.rel (%p221) target = $region32
        $region31: #{lite_stem_forward.1} parent=11 // pred_region
          _
        $region32: #{lite_stem_forward.1} parent=11 // pred_fallthru
          _
        // Predicated region
        $region33: #{lite_stem_forward.1} parent=11 // pred_check
          %p224 = pneg %p168
        $region34: #{lite_stem_forward.1} parent=11 // pred_check_branch
          %226 = sbr.rel (%p224) target = $region36
        $region35: #{lite_stem_forward.1} parent=11 // pred_region
          _
        $region36: #{lite_stem_forward.1} parent=11 // pred_fallthru
          _
      $region12: #{lite_stem_forward.1} parent=5 // pred_fallthru
        _
      %p227 = scmp.lt.s32.totalorder %s16, 2
      // Predicated region
      $region37: #{lite_stem_forward.1} parent=5 // pred_check
        %p228 = pneg %p227
      $region38: #{lite_stem_forward.1} parent=5 // pred_check_branch
        %230 = sbr.rel (%p228) target = $region40
      $region39: #{lite_stem_forward.1} parent=5 // pred_region
        // Predicated region
        $region41: #{lite_stem_forward.1} parent=39 // pred_check
          %p231 = pneg %p36
        $region42: #{lite_stem_forward.1} parent=39 // pred_check_branch
          %233 = sbr.rel (%p231) target = $region44
        $region43: #{lite_stem_forward.1} parent=39 // pred_region
          %p234 = scmp.lt.s32.totalorder %s16, 1
          %s235 = scalar_select %p234, %s16, 1
          %s236 = smul.addr %s235, 18
          %s237 = smul.addr %s236, 8
          %s238 = scalar_lea.vmem %s0, %s237
        $region44: #{lite_stem_forward.1} parent=39 // pred_fallthru
          _
      $region40: #{lite_stem_forward.1} parent=5 // pred_fallthru
        _
      %p239 = scmp.le.s32.totalorder 1, %s16
      %p240 = scmp.lt.s32.totalorder %s16, 3
      %p241 = pnand %p239, %p240
      %p242 = pneg %p241
      // Predicated region
      $region45: #{lite_stem_forward.1} parent=5 // pred_check
        _
      $region46: #{lite_stem_forward.1} parent=5 // pred_check_branch
        %244 = sbr.rel (%p241) target = $region48
      $region47: #{lite_stem_forward.1} parent=5 // pred_region
        %s245 = ssub.s32 %s16, 1
        %p246 = scmp.lt.s32.totalorder %s21, 1
        %s247 = scalar_select %p246, %s21, 1
        %s248 = smul.addr %s247, 18
        %s249 = smul.addr %s248, 8
        %s250 = scalar_lea.vmem %s0, %s249
        %p251 = pneg %p42
        %p252 = pneg %p39
        %p253 = pneg %p63
        %p254 = pneg %p60
        %p255 = pneg %p84
        %p256 = pneg %p81
        %p257 = pneg %p105
        %p258 = pneg %p102
        %p259 = pneg %p126
        %p260 = pneg %p123
        %p261 = pneg %p147
        %p262 = pneg %p144
        %p263 = pneg %p168
        %p264 = pneg %p165
        %p265 = pneg %p194
        %p266 = pneg %p191
        %s267 = sand.u32 %s181, 1
        %s268 = scalar_lea.sflag [#allocation5], %s267
        %s269 = sand.u32 %s181, 1
        %s270 = smul.addr %s269, 64
        %s271 = scalar_lea.vmem [#allocation4], %s270
        %p272 = scmp.lt.s32.totalorder %s21, 1
        %s273 = scalar_select %p272, %s21, 1
        %s274 = smul.addr %s273, 18
        %s275 = smul.addr %s274, 8
        %s276 = scalar_lea.vmem %s0, %s275
        %v278 = vld [vmem:[%s276] sm:$0xff]
        %v279 = vld [vmem:[%s276 + $0x8] sm:$0x1]
        %v280 = vld [vmem:[%s276 + $0x10] sm:$0xff]
        %v281 = vld [vmem:[%s276 + $0x18] sm:$0x1]
        %v282 = vld [vmem:[%s276 + $0x20] sm:$0xff]
        %v283 = vld [vmem:[%s276 + $0x28] sm:$0x1]
        %v284 = vld [vmem:[%s276 + $0x30] sm:$0xff]
        %v285 = vld [vmem:[%s276 + $0x38] sm:$0x1]
        %v286 = vld [vmem:[%s276 + $0x40] sm:$0xff]
        %v287 = vld [vmem:[%s276 + $0x48] sm:$0x1]
        %v288 = vld [vmem:[%s276 + $0x50] sm:$0xff]
        %v289 = vld [vmem:[%s276 + $0x58] sm:$0x1]
        %v290 = vld [vmem:[%s276 + $0x60] sm:$0xff]
        %v291 = vld [vmem:[%s276 + $0x68] sm:$0x1]
        %v292 = vld [vmem:[%s276 + $0x70] sm:$0xff]
        %v293 = vld [vmem:[%s276 + $0x78] sm:$0x1]
        %v294 = vld [vmem:[%s276 + $0x80] sm:$0xff]
        %v295 = vld [vmem:[%s276 + $0x88] sm:$0x1]
        %v296 = vpack.c.bf16 %v280, %v278
        %v297 = vpack.c.bf16 %v284, %v282
        %v298 = vpack.c.bf16 %v288, %v286
        %v299 = vpack.c.bf16 %v292, %v290
        %v300 = vld [vmem:[%s1] sm:$0xf]
        %v301 = vld [vmem:[%s1 + $0x4] sm:$0x3]
        %vm318 = vcmask 1046528
        %v319 = vrot.slane %v278, 1
        %v320 = vrot.slane %v279, 1
        %v321 = vsel %vm318, %v319, %v320
        %v322 = vrot.slane %v280, 1
        %v323 = vrot.slane %v281, 1
        %v324 = vsel %vm318, %v322, %v323
        %v325 = vrot.slane %v282, 1
        %v326 = vrot.slane %v283, 1
        %v327 = vsel %vm318, %v325, %v326
        %v328 = vrot.slane %v284, 1
        %v329 = vrot.slane %v285, 1
        %v330 = vsel %vm318, %v328, %v329
        %v331 = vrot.slane %v286, 1
        %v332 = vrot.slane %v287, 1
        %v333 = vsel %vm318, %v331, %v332
        %v334 = vrot.slane %v288, 1
        %v335 = vrot.slane %v289, 1
        %v336 = vsel %vm318, %v334, %v335
        %v337 = vrot.slane %v290, 1
        %v338 = vrot.slane %v291, 1
        %v339 = vsel %vm318, %v337, %v338
        %v340 = vrot.slane %v292, 1
        %v341 = vrot.slane %v293, 1
        %v342 = vsel %vm318, %v340, %v341
        %v351 = vpack.c.bf16 %v324, %v321
        %v352 = vpack.c.bf16 %v330, %v327
        %v353 = vpack.c.bf16 %v336, %v333
        %v354 = vpack.c.bf16 %v342, %v339
        %s355 = scalar_lea.vmem %s1, 8
        %v356 = vld [vmem:[%s355] sm:$0xf]
        %v357 = vld [vmem:[%s355 + $0x4] sm:$0x3]
        %v360 = vunpack.c.l.b16 %v356
        %v361 = vunpack.c.l.b16 %v357
        %v362 = vpack.c.b16 %v361, %v360
        %vm363 = vcmask 97280
        %v365 = vsel %vm363, %v351, 0
        %v368 = vsel %vm363, %v352, 0
        %v371 = vsel %vm363, %v353, 0
        %v374 = vsel %vm363, %v354, 0
        %vm376 = vcmask 1045504
        %v378 = vsel %vm376, %v362, 0
        %380 = vmatprep.subr.bf16.mxu0 0
        %381 = vmatpush1.bf16.msra.mxu0 %v378
        %382 = vmatprep.subr.bf16.mxu0 0
        %383 = vmatpush1.bf16.msra.mxu0 0
        %384 = vmatprep.subr.bf16.mxu0 0
        %385 = vmatpush1.bf16.msra.mxu0 0
        %386 = vmatprep.subr.bf16.mxu0 0
        %387 = vmatpush1.bf16.msra.mxu0 0
        %388 = vmatprep.subr.bf16.mxu0 0
        %389 = vmatpush1.bf16.msra.mxu0 0
        %390 = vmatprep.subr.bf16.mxu0 0
        %391 = vmatpush1.bf16.msra.mxu0 0
        %392 = vmatprep.subr.bf16.mxu0 0
        %393 = vmatpush1.bf16.msra.mxu0 0
        %394 = vmatprep.subr.bf16.mxu0 0
        %395 = vmatpush1.bf16.msra.mxu0 0
        %396 = vmatprep.subr.bf16.mxu0 0
        %397 = vmatpush1.bf16.msra.mxu0 0
        %398 = vmatprep.subr.bf16.mxu0 0
        %399 = vmatpush1.bf16.msra.mxu0 0
        %400 = vmatprep.subr.bf16.mxu0 0
        %401 = vmatpush1.bf16.msra.mxu0 0
        %402 = vmatprep.subr.bf16.mxu0 0
        %403 = vmatpush1.bf16.msra.mxu0 0
        %404 = vmatprep.subr.bf16.mxu0 0
        %405 = vmatpush1.bf16.msra.mxu0 0
        %406 = vmatprep.subr.bf16.mxu0 0
        %407 = vmatpush1.bf16.msra.mxu0 0
        %408 = vmatprep.subr.bf16.mxu0 0
        %409 = vmatpush1.bf16.msra.mxu0 0
        %410 = vmatprep.subr.bf16.mxu0 0
        %411 = vmatpush1.bf16.msra.mxu0 0
        %412 = vmatprep.mubr.bf16.mxu0 0
        %413 = vmatmul.mubr.bf16.gmra.mrb[0].mxu0 %v365
        %v414 = vpop.f32.mrb[0].mxu0
        %v415 = vadd.f32 0.0, %v414
        %v416 = vpop.f32.mrb[0].mxu0
        %v417 = vpop.f32.mrb[0].mxu0
        %v418 = vadd.f32 0.0, %v417
        %v419 = vpop.f32.mrb[0].mxu0
        %420 = vmatprep.mubr.bf16.mxu0 0
        %421 = vmatmul.mubr.bf16.gmra.mrb[0].mxu0 %v368
        %v422 = vpop.f32.mrb[0].mxu0
        %v423 = vadd.f32 0.0, %v422
        %v424 = vpop.f32.mrb[0].mxu0
        %v425 = vpop.f32.mrb[0].mxu0
        %v426 = vadd.f32 0.0, %v425
        %v427 = vpop.f32.mrb[0].mxu0
        %428 = vmatprep.mubr.bf16.mxu0 0
        %429 = vmatmul.mubr.bf16.gmra.mrb[0].mxu0 %v371
        %v430 = vpop.f32.mrb[0].mxu0
        %v431 = vadd.f32 0.0, %v430
        %v432 = vpop.f32.mrb[0].mxu0
        %v433 = vpop.f32.mrb[0].mxu0
        %v434 = vadd.f32 0.0, %v433
        %v435 = vpop.f32.mrb[0].mxu0
        %436 = vmatprep.mubr.bf16.mxu0 0
        %437 = vmatmul.mubr.bf16.gmra.mrb[0].mxu0 %v374
        %v438 = vpop.f32.mrb[0].mxu0
        %v439 = vadd.f32 0.0, %v438
        %v440 = vpop.f32.mrb[0].mxu0
        %v441 = vpop.f32.mrb[0].mxu0
        %v442 = vadd.f32 0.0, %v441
        %v443 = vpop.f32.mrb[0].mxu0
        %444 = vdwg.mxu0
        %v447 = vunpack.c.l.b16 %v300
        %v448 = vunpack.c.l.b16 %v301
        %v449 = vpack.c.b16 %v448, %v447
        %v451 = vsel %vm363, %v296, 0
        %v454 = vsel %vm363, %v297, 0
        %v457 = vsel %vm363, %v298, 0
        %v460 = vsel %vm363, %v299, 0
        %v463 = vsel %vm376, %v449, 0
        %465 = vmatprep.subr.bf16.mxu0 0
        %466 = vmatpush1.bf16.msra.mxu0 %v463
        %467 = vmatprep.subr.bf16.mxu0 0
        %468 = vmatpush1.bf16.msra.mxu0 0
        %469 = vmatprep.subr.bf16.mxu0 0
        %470 = vmatpush1.bf16.msra.mxu0 0
        %471 = vmatprep.subr.bf16.mxu0 0
        %472 = vmatpush1.bf16.msra.mxu0 0
        %473 = vmatprep.subr.bf16.mxu0 0
        %474 = vmatpush1.bf16.msra.mxu0 0
        %475 = vmatprep.subr.bf16.mxu0 0
        %476 = vmatpush1.bf16.msra.mxu0 0
        %477 = vmatprep.subr.bf16.mxu0 0
        %478 = vmatpush1.bf16.msra.mxu0 0
        %479 = vmatprep.subr.bf16.mxu0 0
        %480 = vmatpush1.bf16.msra.mxu0 0
        %481 = vmatprep.subr.bf16.mxu0 0
        %482 = vmatpush1.bf16.msra.mxu0 0
        %483 = vmatprep.subr.bf16.mxu0 0
        %484 = vmatpush1.bf16.msra.mxu0 0
        %485 = vmatprep.subr.bf16.mxu0 0
        %486 = vmatpush1.bf16.msra.mxu0 0
        %487 = vmatprep.subr.bf16.mxu0 0
        %488 = vmatpush1.bf16.msra.mxu0 0
        %489 = vmatprep.subr.bf16.mxu0 0
        %490 = vmatpush1.bf16.msra.mxu0 0
        %491 = vmatprep.subr.bf16.mxu0 0
        %492 = vmatpush1.bf16.msra.mxu0 0
        %493 = vmatprep.subr.bf16.mxu0 0
        %494 = vmatpush1.bf16.msra.mxu0 0
        %495 = vmatprep.subr.bf16.mxu0 0
        %496 = vmatpush1.bf16.msra.mxu0 0
        %497 = vmatprep.mubr.bf16.mxu0 0
        %498 = vmatmul.mubr.bf16.gmra.mrb[0].mxu0 %v451
        %v499 = vpop.f32.mrb[0].mxu0
        %v500 = vadd.f32 %v415, %v499
        %v501 = vpop.f32.mrb[0].mxu0
        %v502 = vpop.f32.mrb[0].mxu0
        %v503 = vadd.f32 %v418, %v502
        %v504 = vpop.f32.mrb[0].mxu0
        %505 = vmatprep.mubr.bf16.mxu0 0
        %506 = vmatmul.mubr.bf16.gmra.mrb[0].mxu0 %v454
        %v507 = vpop.f32.mrb[0].mxu0
        %v508 = vadd.f32 %v423, %v507
        %v509 = vpop.f32.mrb[0].mxu0
        %v510 = vpop.f32.mrb[0].mxu0
        %v511 = vadd.f32 %v426, %v510
        %v512 = vpop.f32.mrb[0].mxu0
        %513 = vmatprep.mubr.bf16.mxu0 0
        %514 = vmatmul.mubr.bf16.gmra.mrb[0].mxu0 %v457
        %v515 = vpop.f32.mrb[0].mxu0
        %v516 = vadd.f32 %v431, %v515
        %v517 = vpop.f32.mrb[0].mxu0
        %v518 = vpop.f32.mrb[0].mxu0
        %v519 = vadd.f32 %v434, %v518
        %v520 = vpop.f32.mrb[0].mxu0
        %521 = vmatprep.mubr.bf16.mxu0 0
        %522 = vmatmul.mubr.bf16.gmra.mrb[0].mxu0 %v460
        %v523 = vpop.f32.mrb[0].mxu0
        %v524 = vadd.f32 %v439, %v523
        %v525 = vpop.f32.mrb[0].mxu0
        %v526 = vpop.f32.mrb[0].mxu0
        %v527 = vadd.f32 %v442, %v526
        %v528 = vpop.f32.mrb[0].mxu0
        %529 = vdwg.mxu0
        %v530 = vpack.c.bf16 %v282, %v280
        %v531 = vpack.c.bf16 %v286, %v284
        %v532 = vpack.c.bf16 %v290, %v288
        %v533 = vpack.c.bf16 %v294, %v292
        %s534 = scalar_lea.vmem %s1, 16
        %v535 = vld [vmem:[%s534] sm:$0xf]
        %v536 = vld [vmem:[%s534 + $0x4] sm:$0x3]
        %v539 = vunpack.c.l.b16 %v535
        %v540 = vunpack.c.l.b16 %v536
        %v541 = vpack.c.b16 %v540, %v539
        %v543 = vsel %vm363, %v530, 0
        %v546 = vsel %vm363, %v531, 0
        %v549 = vsel %vm363, %v532, 0
        %v552 = vsel %vm363, %v533, 0
        %v555 = vsel %vm376, %v541, 0
        %557 = vmatprep.subr.bf16.mxu0 0
        %558 = vmatpush1.bf16.msra.mxu0 %v555
        %559 = vmatprep.subr.bf16.mxu0 0
        %560 = vmatpush1.bf16.msra.mxu0 0
        %561 = vmatprep.subr.bf16.mxu0 0
        %562 = vmatpush1.bf16.msra.mxu0 0
        %563 = vmatprep.subr.bf16.mxu0 0
        %564 = vmatpush1.bf16.msra.mxu0 0
        %565 = vmatprep.subr.bf16.mxu0 0
        %566 = vmatpush1.bf16.msra.mxu0 0
        %567 = vmatprep.subr.bf16.mxu0 0
        %568 = vmatpush1.bf16.msra.mxu0 0
        %569 = vmatprep.subr.bf16.mxu0 0
        %570 = vmatpush1.bf16.msra.mxu0 0
        %571 = vmatprep.subr.bf16.mxu0 0
        %572 = vmatpush1.bf16.msra.mxu0 0
        %573 = vmatprep.subr.bf16.mxu0 0
        %574 = vmatpush1.bf16.msra.mxu0 0
        %575 = vmatprep.subr.bf16.mxu0 0
        %576 = vmatpush1.bf16.msra.mxu0 0
        %577 = vmatprep.subr.bf16.mxu0 0
        %578 = vmatpush1.bf16.msra.mxu0 0
        %579 = vmatprep.subr.bf16.mxu0 0
        %580 = vmatpush1.bf16.msra.mxu0 0
        %581 = vmatprep.subr.bf16.mxu0 0
        %582 = vmatpush1.bf16.msra.mxu0 0
        %583 = vmatprep.subr.bf16.mxu0 0
        %584 = vmatpush1.bf16.msra.mxu0 0
        %585 = vmatprep.subr.bf16.mxu0 0
        %586 = vmatpush1.bf16.msra.mxu0 0
        %587 = vmatprep.subr.bf16.mxu0 0
        %588 = vmatpush1.bf16.msra.mxu0 0
        %589 = vmatprep.mubr.bf16.mxu0 0
        %590 = vmatmul.mubr.bf16.gmra.mrb[0].mxu0 %v543
        %v591 = vpop.f32.mrb[0].mxu0
        %v592 = vadd.f32 0.0, %v591
        %v593 = vpop.f32.mrb[0].mxu0
        %v594 = vpop.f32.mrb[0].mxu0
        %v595 = vadd.f32 0.0, %v594
        %v596 = vpop.f32.mrb[0].mxu0
        %597 = vmatprep.mubr.bf16.mxu0 0
        %598 = vmatmul.mubr.bf16.gmra.mrb[0].mxu0 %v546
        %v599 = vpop.f32.mrb[0].mxu0
        %v600 = vadd.f32 0.0, %v599
        %v601 = vpop.f32.mrb[0].mxu0
        %v602 = vpop.f32.mrb[0].mxu0
        %v603 = vadd.f32 0.0, %v602
        %v604 = vpop.f32.mrb[0].mxu0
        %605 = vmatprep.mubr.bf16.mxu0 0
        %606 = vmatmul.mubr.bf16.gmra.mrb[0].mxu0 %v549
        %v607 = vpop.f32.mrb[0].mxu0
        %v608 = vadd.f32 0.0, %v607
        %v609 = vpop.f32.mrb[0].mxu0
        %v610 = vpop.f32.mrb[0].mxu0
        %v611 = vadd.f32 0.0, %v610
        %v612 = vpop.f32.mrb[0].mxu0
        %613 = vmatprep.mubr.bf16.mxu0 0
        %614 = vmatmul.mubr.bf16.gmra.mrb[0].mxu0 %v552
        %v615 = vpop.f32.mrb[0].mxu0
        %v616 = vadd.f32 0.0, %v615
        %v617 = vpop.f32.mrb[0].mxu0
        %v618 = vpop.f32.mrb[0].mxu0
        %v619 = vadd.f32 0.0, %v618
        %v620 = vpop.f32.mrb[0].mxu0
        %621 = vdwg.mxu0
        %v622 = vadd.f32 %v500, %v592
        %v623 = vadd.f32 %v503, %v595
        %v624 = vadd.f32 %v508, %v600
        %v625 = vadd.f32 %v511, %v603
        %v626 = vadd.f32 %v516, %v608
        %v627 = vadd.f32 %v519, %v611
        %v628 = vadd.f32 %v524, %v616
        %v629 = vadd.f32 %v527, %v619
        %v632 = vrot.slane %v294, 1
        %v633 = vrot.slane %v295, 1
        %v634 = vsel %vm318, %v632, %v633
        %v636 = vpack.c.bf16 %v327, %v324
        %v637 = vpack.c.bf16 %v333, %v330
        %v638 = vpack.c.bf16 %v339, %v336
        %v639 = vpack.c.bf16 %v634, %v342
        %s640 = scalar_lea.vmem %s1, 24
        %v641 = vld [vmem:[%s640] sm:$0xf]
        %v642 = vld [vmem:[%s640 + $0x4] sm:$0x3]
        %v645 = vunpack.c.l.b16 %v641
        %v646 = vunpack.c.l.b16 %v642
        %v647 = vpack.c.b16 %v646, %v645
        %v649 = vsel %vm363, %v636, 0
        %v652 = vsel %vm363, %v637, 0
        %v655 = vsel %vm363, %v638, 0
        %v658 = vsel %vm363, %v639, 0
        %v661 = vsel %vm376, %v647, 0
        %663 = vmatprep.subr.bf16.mxu0 0
        %664 = vmatpush1.bf16.msra.mxu0 %v661
        %665 = vmatprep.subr.bf16.mxu0 0
        %666 = vmatpush1.bf16.msra.mxu0 0
        %667 = vmatprep.subr.bf16.mxu0 0
        %668 = vmatpush1.bf16.msra.mxu0 0
        %669 = vmatprep.subr.bf16.mxu0 0
        %670 = vmatpush1.bf16.msra.mxu0 0
        %671 = vmatprep.subr.bf16.mxu0 0
        %672 = vmatpush1.bf16.msra.mxu0 0
        %673 = vmatprep.subr.bf16.mxu0 0
        %674 = vmatpush1.bf16.msra.mxu0 0
        %675 = vmatprep.subr.bf16.mxu0 0
        %676 = vmatpush1.bf16.msra.mxu0 0
        %677 = vmatprep.subr.bf16.mxu0 0
        %678 = vmatpush1.bf16.msra.mxu0 0
        %679 = vmatprep.subr.bf16.mxu0 0
        %680 = vmatpush1.bf16.msra.mxu0 0
        %681 = vmatprep.subr.bf16.mxu0 0
        %682 = vmatpush1.bf16.msra.mxu0 0
        %683 = vmatprep.subr.bf16.mxu0 0
        %684 = vmatpush1.bf16.msra.mxu0 0
        %685 = vmatprep.subr.bf16.mxu0 0
        %686 = vmatpush1.bf16.msra.mxu0 0
        %687 = vmatprep.subr.bf16.mxu0 0
        %688 = vmatpush1.bf16.msra.mxu0 0
        %689 = vmatprep.subr.bf16.mxu0 0
        %690 = vmatpush1.bf16.msra.mxu0 0
        %691 = vmatprep.subr.bf16.mxu0 0
        %692 = vmatpush1.bf16.msra.mxu0 0
        %693 = vmatprep.subr.bf16.mxu0 0
        %694 = vmatpush1.bf16.msra.mxu0 0
        %695 = vmatprep.mubr.bf16.mxu0 0
        %696 = vmatmul.mubr.bf16.gmra.mrb[0].mxu0 %v649
        %v697 = vpop.f32.mrb[0].mxu0
        %v698 = vadd.f32 0.0, %v697
        %v699 = vpop.f32.mrb[0].mxu0
        %v700 = vpop.f32.mrb[0].mxu0
        %v701 = vadd.f32 0.0, %v700
        %v702 = vpop.f32.mrb[0].mxu0
        %703 = vmatprep.mubr.bf16.mxu0 0
        %704 = vmatmul.mubr.bf16.gmra.mrb[0].mxu0 %v652
        %v705 = vpop.f32.mrb[0].mxu0
        %v706 = vadd.f32 0.0, %v705
        %v707 = vpop.f32.mrb[0].mxu0
        %v708 = vpop.f32.mrb[0].mxu0
        %v709 = vadd.f32 0.0, %v708
        %v710 = vpop.f32.mrb[0].mxu0
        %711 = vmatprep.mubr.bf16.mxu0 0
        %712 = vmatmul.mubr.bf16.gmra.mrb[0].mxu0 %v655
        %v713 = vpop.f32.mrb[0].mxu0
        %v714 = vadd.f32 0.0, %v713
        %v715 = vpop.f32.mrb[0].mxu0
        %v716 = vpop.f32.mrb[0].mxu0
        %v717 = vadd.f32 0.0, %v716
        %v718 = vpop.f32.mrb[0].mxu0
        %719 = vmatprep.mubr.bf16.mxu0 0
        %720 = vmatmul.mubr.bf16.gmra.mrb[0].mxu0 %v658
        %v721 = vpop.f32.mrb[0].mxu0
        %v722 = vadd.f32 0.0, %v721
        %v723 = vpop.f32.mrb[0].mxu0
        %v724 = vpop.f32.mrb[0].mxu0
        %v725 = vadd.f32 0.0, %v724
        %v726 = vpop.f32.mrb[0].mxu0
        %727 = vdwg.mxu0
        %v728 = vadd.f32 %v622, %v698
        %v729 = vadd.f32 %v623, %v701
        %v730 = vadd.f32 %v624, %v706
        %v731 = vadd.f32 %v625, %v709
        %v732 = vadd.f32 %v626, %v714
        %v733 = vadd.f32 %v627, %v717
        %v734 = vadd.f32 %v628, %v722
        %v735 = vadd.f32 %v629, %v725
        %v736 = vld [vmem:[%s2] sm:$0x1]
        %v738 = vlaneseq
        %v739 = vshrl.u32 %v738, 7
        %v740 = vsub.s32 0, %v739
        %v741 = vrot.slane %v736, %v740
        %v743 = vadd.f32 %v728, %v741
        %v744 = vadd.f32 %v729, %v741
        %v745 = vadd.f32 %v730, %v741
        %v746 = vadd.f32 %v731, %v741
        %v747 = vadd.f32 %v732, %v741
        %v748 = vadd.f32 %v733, %v741
        %v749 = vadd.f32 %v734, %v741
        %v750 = vadd.f32 %v735, %v741
        %v751 = vmax.f32 %v743, 0.0
        %v752 = vmax.f32 %v744, 0.0
        %v753 = vmax.f32 %v745, 0.0
        %v754 = vmax.f32 %v746, 0.0
        %v755 = vmax.f32 %v747, 0.0
        %v756 = vmax.f32 %v748, 0.0
        %v757 = vmax.f32 %v749, 0.0
        %v758 = vmax.f32 %v750, 0.0
        %vm759 = vcmask 261120
        %760 = vst.msk [vmem:[#allocation2] sm:$0xff] %vm759, 0.0
        %vm761 = vcmask 254976
        %762 = vst.msk [vmem:[#allocation2 + $0x8] sm:$0x3] %vm761, 0.0
        %763 = vst.msk [vmem:[#allocation2 + $0x10] sm:$0xff] %vm759, 0.0
        %764 = vst.msk [vmem:[#allocation2 + $0x18] sm:$0x3] %vm761, 0.0
        %765 = vst.msk [vmem:[#allocation2 + $0x20] sm:$0xff] %vm759, 0.0
        %766 = vst.msk [vmem:[#allocation2 + $0x28] sm:$0x3] %vm761, 0.0
        %767 = vst.msk [vmem:[#allocation2 + $0x30] sm:$0xff] %vm759, 0.0
        %768 = vst.msk [vmem:[#allocation2 + $0x38] sm:$0x3] %vm761, 0.0
        %769 = vst.msk [vmem:[#allocation2 + $0x40] sm:$0xff] %vm759, 0.0
        %770 = vst.msk [vmem:[#allocation2 + $0x48] sm:$0x3] %vm761, 0.0
        %771 = vst.msk [vmem:[#allocation2 + $0x50] sm:$0xff] %vm759, 0.0
        %772 = vst.msk [vmem:[#allocation2 + $0x58] sm:$0x3] %vm761, 0.0
        %773 = vst.msk [vmem:[#allocation2 + $0x60] sm:$0xff] %vm759, 0.0
        %774 = vst.msk [vmem:[#allocation2 + $0x68] sm:$0x3] %vm761, 0.0
        %775 = vst.msk [vmem:[#allocation2 + $0x70] sm:$0xff] %vm759, 0.0
        %776 = vst.msk [vmem:[#allocation2 + $0x78] sm:$0x3] %vm761, 0.0
        %777 = vst.msk [vmem:[#allocation2 + $0x80] sm:$0xff] %vm759, 0.0
        %778 = vst.msk [vmem:[#allocation2 + $0x88] sm:$0x3] %vm761, 0.0
        %779 = vst.msk [vmem:[#allocation2 + $0x90] sm:$0xff] %vm759, 0.0
        %780 = vst.msk [vmem:[#allocation2 + $0x98] sm:$0x3] %vm761, 0.0
        %s781 = scalar_lea.vmem [#allocation2], 16
        %782 = vst.msk [vmem:[%s781 + $0x1] sm:$0xff] %vm759, %v751
        %783 = vst.msk [vmem:[%s781 + $0x11] sm:$0xff] %vm759, %v752
        %784 = vst.msk [vmem:[%s781 + $0x21] sm:$0xff] %vm759, %v753
        %785 = vst.msk [vmem:[%s781 + $0x31] sm:$0xff] %vm759, %v754
        %786 = vst.msk [vmem:[%s781 + $0x41] sm:$0xff] %vm759, %v755
        %787 = vst.msk [vmem:[%s781 + $0x51] sm:$0xff] %vm759, %v756
        %788 = vst.msk [vmem:[%s781 + $0x61] sm:$0xff] %vm759, %v757
        %789 = vst.msk [vmem:[%s781 + $0x71] sm:$0xff] %vm759, %v758
        %v790 = vld [vmem:[#allocation2] sm:$0xff]
        %v791 = vld [vmem:[#allocation2 + $0x10] sm:$0xff]
        %v792 = vld [vmem:[#allocation2 + $0x20] sm:$0xff]
        %v793 = vld [vmem:[#allocation2 + $0x30] sm:$0xff]
        %v794 = vld [vmem:[#allocation2 + $0x40] sm:$0xff]
        %v795 = vld [vmem:[#allocation2 + $0x50] sm:$0xff]
        %v796 = vld [vmem:[#allocation2 + $0x60] sm:$0xff]
        %v797 = vld [vmem:[#allocation2 + $0x70] sm:$0xff]
        %v798 = vpack.c.bf16 %v791, %v790
        %v799 = vpack.c.bf16 %v793, %v792
        %v800 = vpack.c.bf16 %v795, %v794
        %v801 = vpack.c.bf16 %v797, %v796
        %v802 = vld [vmem:[%s3] sm:$0xf]
        %v803 = vld [vmem:[%s3 + $0x4] sm:$0xf]
        %v804 = vld [vmem:[%s3 + $0x8] sm:$0xf]
        %v805 = vld [vmem:[%s3 + $0xc] sm:$0xf]
        %v806 = vld [vmem:[#allocation2 + $0x1] sm:$0xff]
        %v807 = vld [vmem:[#allocation2 + $0x11] sm:$0xff]
        %v808 = vld [vmem:[#allocation2 + $0x21] sm:$0xff]
        %v809 = vld [vmem:[#allocation2 + $0x31] sm:$0xff]
        %v810 = vld [vmem:[#allocation2 + $0x41] sm:$0xff]
        %v811 = vld [vmem:[#allocation2 + $0x51] sm:$0xff]
        %v812 = vld [vmem:[#allocation2 + $0x61] sm:$0xff]
        %v813 = vld [vmem:[#allocation2 + $0x71] sm:$0xff]
        %v814 = vpack.c.bf16 %v807, %v806
        %v815 = vpack.c.bf16 %v809, %v808
        %v816 = vpack.c.bf16 %v811, %v810
        %v817 = vpack.c.bf16 %v813, %v812
        %s818 = scalar_lea.vmem %s3, 16
        %v819 = vld [vmem:[%s818] sm:$0xf]
        %v820 = vld [vmem:[%s818 + $0x4] sm:$0xf]
        %v821 = vld [vmem:[%s818 + $0x8] sm:$0xf]
        %v822 = vld [vmem:[%s818 + $0xc] sm:$0xf]
        %v827 = vunpack.c.l.b16 %v819
        %v828 = vunpack.c.l.b16 %v820
        %v829 = vunpack.c.l.b16 %v821
        %v830 = vunpack.c.l.b16 %v822
        %v831 = vpack.c.b16 %v828, %v827
        %v832 = vpack.c.b16 %v830, %v829
        %v836 = vsel %vm759, %v814, 0
        %v839 = vsel %vm759, %v815, 0
        %v842 = vsel %vm759, %v816, 0
        %v845 = vsel %vm759, %v817, 0
        %847 = vmatprep.subr.bf16.mxu0 0
        %848 = vmatpush1.bf16.msra.mxu0 %v831
        %849 = vmatprep.subr.bf16.mxu0 0
        %850 = vmatpush1.bf16.msra.mxu0 %v832
        %851 = vmatprep.subr.bf16.mxu0 0
        %852 = vmatpush1.bf16.msra.mxu0 0
        %853 = vmatprep.subr.bf16.mxu0 0
        %854 = vmatpush1.bf16.msra.mxu0 0
        %855 = vmatprep.subr.bf16.mxu0 0
        %856 = vmatpush1.bf16.msra.mxu0 0
        %857 = vmatprep.subr.bf16.mxu0 0
        %858 = vmatpush1.bf16.msra.mxu0 0
        %859 = vmatprep.subr.bf16.mxu0 0
        %860 = vmatpush1.bf16.msra.mxu0 0
        %861 = vmatprep.subr.bf16.mxu0 0
        %862 = vmatpush1.bf16.msra.mxu0 0
        %863 = vmatprep.subr.bf16.mxu0 0
        %864 = vmatpush1.bf16.msra.mxu0 0
        %865 = vmatprep.subr.bf16.mxu0 0
        %866 = vmatpush1.bf16.msra.mxu0 0
        %867 = vmatprep.subr.bf16.mxu0 0
        %868 = vmatpush1.bf16.msra.mxu0 0
        %869 = vmatprep.subr.bf16.mxu0 0
        %870 = vmatpush1.bf16.msra.mxu0 0
        %871 = vmatprep.subr.bf16.mxu0 0
        %872 = vmatpush1.bf16.msra.mxu0 0
        %873 = vmatprep.subr.bf16.mxu0 0
        %874 = vmatpush1.bf16.msra.mxu0 0
        %875 = vmatprep.subr.bf16.mxu0 0
        %876 = vmatpush1.bf16.msra.mxu0 0
        %877 = vmatprep.subr.bf16.mxu0 0
        %878 = vmatpush1.bf16.msra.mxu0 0
        %879 = vmatprep.mubr.bf16.mxu0 0
        %880 = vmatmul.mubr.bf16.gmra.mrb[0].mxu0 %v836
        %v881 = vpop.f32.mrb[0].mxu0
        %v882 = vadd.f32 0.0, %v881
        %v883 = vpop.f32.mrb[0].mxu0
        %v884 = vpop.f32.mrb[0].mxu0
        %v885 = vadd.f32 0.0, %v884
        %v886 = vpop.f32.mrb[0].mxu0
        %887 = vmatprep.mubr.bf16.mxu0 0
        %888 = vmatmul.mubr.bf16.gmra.mrb[0].mxu0 %v839
        %v889 = vpop.f32.mrb[0].mxu0
        %v890 = vadd.f32 0.0, %v889
        %v891 = vpop.f32.mrb[0].mxu0
        %v892 = vpop.f32.mrb[0].mxu0
        %v893 = vadd.f32 0.0, %v892
        %v894 = vpop.f32.mrb[0].mxu0
        %895 = vmatprep.mubr.bf16.mxu0 0
        %896 = vmatmul.mubr.bf16.gmra.mrb[0].mxu0 %v842
        %v897 = vpop.f32.mrb[0].mxu0
        %v898 = vadd.f32 0.0, %v897
        %v899 = vpop.f32.mrb[0].mxu0
        %v900 = vpop.f32.mrb[0].mxu0
        %v901 = vadd.f32 0.0, %v900
        %v902 = vpop.f32.mrb[0].mxu0
        %903 = vmatprep.mubr.bf16.mxu0 0
        %904 = vmatmul.mubr.bf16.gmra.mrb[0].mxu0 %v845
        %v905 = vpop.f32.mrb[0].mxu0
        %v906 = vadd.f32 0.0, %v905
        %v907 = vpop.f32.mrb[0].mxu0
        %v908 = vpop.f32.mrb[0].mxu0
        %v909 = vadd.f32 0.0, %v908
        %v910 = vpop.f32.mrb[0].mxu0
        %911 = vdwg.mxu0
        %v916 = vunpack.c.l.b16 %v802
        %v917 = vunpack.c.l.b16 %v803
        %v918 = vunpack.c.l.b16 %v804
        %v919 = vunpack.c.l.b16 %v805
        %v920 = vpack.c.b16 %v917, %v916
        %v921 = vpack.c.b16 %v919, %v918
        %v925 = vsel %vm759, %v798, 0
        %v928 = vsel %vm759, %v799, 0
        %v931 = vsel %vm759, %v800, 0
        %v934 = vsel %vm759, %v801, 0
        %936 = vmatprep.subr.bf16.mxu0 0
        %937 = vmatpush1.bf16.msra.mxu0 %v920
        %938 = vmatprep.subr.bf16.mxu0 0
        %939 = vmatpush1.bf16.msra.mxu0 %v921
        %940 = vmatprep.subr.bf16.mxu0 0
        %941 = vmatpush1.bf16.msra.mxu0 0
        %942 = vmatprep.subr.bf16.mxu0 0
        %943 = vmatpush1.bf16.msra.mxu0 0
        %944 = vmatprep.subr.bf16.mxu0 0
        %945 = vmatpush1.bf16.msra.mxu0 0
        %946 = vmatprep.subr.bf16.mxu0 0
        %947 = vmatpush1.bf16.msra.mxu0 0
        %948 = vmatprep.subr.bf16.mxu0 0
        %949 = vmatpush1.bf16.msra.mxu0 0
        %950 = vmatprep.subr.bf16.mxu0 0
        %951 = vmatpush1.bf16.msra.mxu0 0
        %952 = vmatprep.subr.bf16.mxu0 0
        %953 = vmatpush1.bf16.msra.mxu0 0
        %954 = vmatprep.subr.bf16.mxu0 0
        %955 = vmatpush1.bf16.msra.mxu0 0
        %956 = vmatprep.subr.bf16.mxu0 0
        %957 = vmatpush1.bf16.msra.mxu0 0
        %958 = vmatprep.subr.bf16.mxu0 0
        %959 = vmatpush1.bf16.msra.mxu0 0
        %960 = vmatprep.subr.bf16.mxu0 0
        %961 = vmatpush1.bf16.msra.mxu0 0
        %962 = vmatprep.subr.bf16.mxu0 0
        %963 = vmatpush1.bf16.msra.mxu0 0
        %964 = vmatprep.subr.bf16.mxu0 0
        %965 = vmatpush1.bf16.msra.mxu0 0
        %966 = vmatprep.subr.bf16.mxu0 0
        %967 = vmatpush1.bf16.msra.mxu0 0
        %968 = vmatprep.mubr.bf16.mxu0 0
        %969 = vmatmul.mubr.bf16.gmra.mrb[0].mxu0 %v925
        %v970 = vpop.f32.mrb[0].mxu0
        %v971 = vadd.f32 %v882, %v970
        %v972 = vpop.f32.mrb[0].mxu0
        %v973 = vpop.f32.mrb[0].mxu0
        %v974 = vadd.f32 %v885, %v973
        %v975 = vpop.f32.mrb[0].mxu0
        %976 = vmatprep.mubr.bf16.mxu0 0
        %977 = vmatmul.mubr.bf16.gmra.mrb[0].mxu0 %v928
        %v978 = vpop.f32.mrb[0].mxu0
        %v979 = vadd.f32 %v890, %v978
        %v980 = vpop.f32.mrb[0].mxu0
        %v981 = vpop.f32.mrb[0].mxu0
        %v982 = vadd.f32 %v893, %v981
        %v983 = vpop.f32.mrb[0].mxu0
        %984 = vmatprep.mubr.bf16.mxu0 0
        %985 = vmatmul.mubr.bf16.gmra.mrb[0].mxu0 %v931
        %v986 = vpop.f32.mrb[0].mxu0
        %v987 = vadd.f32 %v898, %v986
        %v988 = vpop.f32.mrb[0].mxu0
        %v989 = vpop.f32.mrb[0].mxu0
        %v990 = vadd.f32 %v901, %v989
        %v991 = vpop.f32.mrb[0].mxu0
        %992 = vmatprep.mubr.bf16.mxu0 0
        %993 = vmatmul.mubr.bf16.gmra.mrb[0].mxu0 %v934
        %v994 = vpop.f32.mrb[0].mxu0
        %v995 = vadd.f32 %v906, %v994
        %v996 = vpop.f32.mrb[0].mxu0
        %v997 = vpop.f32.mrb[0].mxu0
        %v998 = vadd.f32 %v909, %v997
        %v999 = vpop.f32.mrb[0].mxu0
        %1000 = vdwg.mxu0
        %v1001 = vld [vmem:[#allocation2 + $0x2] sm:$0xff]
        %v1002 = vld [vmem:[#allocation2 + $0x12] sm:$0xff]
        %v1003 = vld [vmem:[#allocation2 + $0x22] sm:$0xff]
        %v1004 = vld [vmem:[#allocation2 + $0x32] sm:$0xff]
        %v1005 = vld [vmem:[#allocation2 + $0x42] sm:$0xff]
        %v1006 = vld [vmem:[#allocation2 + $0x52] sm:$0xff]
        %v1007 = vld [vmem:[#allocation2 + $0x62] sm:$0xff]
        %v1008 = vld [vmem:[#allocation2 + $0x72] sm:$0xff]
        %v1009 = vpack.c.bf16 %v1002, %v1001
        %v1010 = vpack.c.bf16 %v1004, %v1003
        %v1011 = vpack.c.bf16 %v1006, %v1005
        %v1012 = vpack.c.bf16 %v1008, %v1007
        %s1013 = scalar_lea.vmem %s3, 32
        %v1014 = vld [vmem:[%s1013] sm:$0xf]
        %v1015 = vld [vmem:[%s1013 + $0x4] sm:$0xf]
        %v1016 = vld [vmem:[%s1013 + $0x8] sm:$0xf]
        %v1017 = vld [vmem:[%s1013 + $0xc] sm:$0xf]
        %v1022 = vunpack.c.l.b16 %v1014
        %v1023 = vunpack.c.l.b16 %v1015
        %v1024 = vunpack.c.l.b16 %v1016
        %v1025 = vunpack.c.l.b16 %v1017
        %v1026 = vpack.c.b16 %v1023, %v1022
        %v1027 = vpack.c.b16 %v1025, %v1024
        %v1031 = vsel %vm759, %v1009, 0
        %v1034 = vsel %vm759, %v1010, 0
        %v1037 = vsel %vm759, %v1011, 0
        %v1040 = vsel %vm759, %v1012, 0
        %1042 = vmatprep.subr.bf16.mxu0 0
        %1043 = vmatpush1.bf16.msra.mxu0 %v1026
        %1044 = vmatprep.subr.bf16.mxu0 0
        %1045 = vmatpush1.bf16.msra.mxu0 %v1027
        %1046 = vmatprep.subr.bf16.mxu0 0
        %1047 = vmatpush1.bf16.msra.mxu0 0
        %1048 = vmatprep.subr.bf16.mxu0 0
        %1049 = vmatpush1.bf16.msra.mxu0 0
        %1050 = vmatprep.subr.bf16.mxu0 0
        %1051 = vmatpush1.bf16.msra.mxu0 0
        %1052 = vmatprep.subr.bf16.mxu0 0
        %1053 = vmatpush1.bf16.msra.mxu0 0
        %1054 = vmatprep.subr.bf16.mxu0 0
        %1055 = vmatpush1.bf16.msra.mxu0 0
        %1056 = vmatprep.subr.bf16.mxu0 0
        %1057 = vmatpush1.bf16.msra.mxu0 0
        %1058 = vmatprep.subr.bf16.mxu0 0
        %1059 = vmatpush1.bf16.msra.mxu0 0
        %1060 = vmatprep.subr.bf16.mxu0 0
        %1061 = vmatpush1.bf16.msra.mxu0 0
        %1062 = vmatprep.subr.bf16.mxu0 0
        %1063 = vmatpush1.bf16.msra.mxu0 0
        %1064 = vmatprep.subr.bf16.mxu0 0
        %1065 = vmatpush1.bf16.msra.mxu0 0
        %1066 = vmatprep.subr.bf16.mxu0 0
        %1067 = vmatpush1.bf16.msra.mxu0 0
        %1068 = vmatprep.subr.bf16.mxu0 0
        %1069 = vmatpush1.bf16.msra.mxu0 0
        %1070 = vmatprep.subr.bf16.mxu0 0
        %1071 = vmatpush1.bf16.msra.mxu0 0
        %1072 = vmatprep.subr.bf16.mxu0 0
        %1073 = vmatpush1.bf16.msra.mxu0 0
        %1074 = vmatprep.mubr.bf16.mxu0 0
        %1075 = vmatmul.mubr.bf16.gmra.mrb[0].mxu0 %v1031
        %v1076 = vpop.f32.mrb[0].mxu0
        %v1077 = vadd.f32 0.0, %v1076
        %v1078 = vpop.f32.mrb[0].mxu0
        %v1079 = vpop.f32.mrb[0].mxu0
        %v1080 = vadd.f32 0.0, %v1079
        %v1081 = vpop.f32.mrb[0].mxu0
        %1082 = vmatprep.mubr.bf16.mxu0 0
        %1083 = vmatmul.mubr.bf16.gmra.mrb[0].mxu0 %v1034
        %v1084 = vpop.f32.mrb[0].mxu0
        %v1085 = vadd.f32 0.0, %v1084
        %v1086 = vpop.f32.mrb[0].mxu0
        %v1087 = vpop.f32.mrb[0].mxu0
        %v1088 = vadd.f32 0.0, %v1087
        %v1089 = vpop.f32.mrb[0].mxu0
        %1090 = vmatprep.mubr.bf16.mxu0 0
        %1091 = vmatmul.mubr.bf16.gmra.mrb[0].mxu0 %v1037
        %v1092 = vpop.f32.mrb[0].mxu0
        %v1093 = vadd.f32 0.0, %v1092
        %v1094 = vpop.f32.mrb[0].mxu0
        %v1095 = vpop.f32.mrb[0].mxu0
        %v1096 = vadd.f32 0.0, %v1095
        %v1097 = vpop.f32.mrb[0].mxu0
        %1098 = vmatprep.mubr.bf16.mxu0 0
        %1099 = vmatmul.mubr.bf16.gmra.mrb[0].mxu0 %v1040
        %v1100 = vpop.f32.mrb[0].mxu0
        %v1101 = vadd.f32 0.0, %v1100
        %v1102 = vpop.f32.mrb[0].mxu0
        %v1103 = vpop.f32.mrb[0].mxu0
        %v1104 = vadd.f32 0.0, %v1103
        %v1105 = vpop.f32.mrb[0].mxu0
        %1106 = vdwg.mxu0
        %v1107 = vadd.f32 %v971, %v1077
        %v1108 = vadd.f32 %v974, %v1080
        %v1109 = vadd.f32 %v979, %v1085
        %v1110 = vadd.f32 %v982, %v1088
        %v1111 = vadd.f32 %v987, %v1093
        %v1112 = vadd.f32 %v990, %v1096
        %v1113 = vadd.f32 %v995, %v1101
        %v1114 = vadd.f32 %v998, %v1104
        %v1115 = vld [vmem:[%s781] sm:$0xff]
        %v1116 = vld [vmem:[%s781 + $0x10] sm:$0xff]
        %v1117 = vld [vmem:[%s781 + $0x20] sm:$0xff]
        %v1118 = vld [vmem:[%s781 + $0x30] sm:$0xff]
        %v1119 = vld [vmem:[%s781 + $0x40] sm:$0xff]
        %v1120 = vld [vmem:[%s781 + $0x50] sm:$0xff]
        %v1121 = vld [vmem:[%s781 + $0x60] sm:$0xff]
        %v1122 = vld [vmem:[%s781 + $0x70] sm:$0xff]
        %v1123 = vpack.c.bf16 %v1116, %v1115
        %v1124 = vpack.c.bf16 %v1118, %v1117
        %v1125 = vpack.c.bf16 %v1120, %v1119
        %v1126 = vpack.c.bf16 %v1122, %v1121
        %s1127 = scalar_lea.vmem %s3, 48
        %v1128 = vld [vmem:[%s1127] sm:$0xf]
        %v1129 = vld [vmem:[%s1127 + $0x4] sm:$0xf]
        %v1130 = vld [vmem:[%s1127 + $0x8] sm:$0xf]
        %v1131 = vld [vmem:[%s1127 + $0xc] sm:$0xf]
        %v1136 = vunpack.c.l.b16 %v1128
        %v1137 = vunpack.c.l.b16 %v1129
        %v1138 = vunpack.c.l.b16 %v1130
        %v1139 = vunpack.c.l.b16 %v1131
        %v1140 = vpack.c.b16 %v1137, %v1136
        %v1141 = vpack.c.b16 %v1139, %v1138
        %v1145 = vsel %vm759, %v1123, 0
        %v1148 = vsel %vm759, %v1124, 0
        %v1151 = vsel %vm759, %v1125, 0
        %v1154 = vsel %vm759, %v1126, 0
        %1156 = vmatprep.subr.bf16.mxu0 0
        %1157 = vmatpush1.bf16.msra.mxu0 %v1140
        %1158 = vmatprep.subr.bf16.mxu0 0
        %1159 = vmatpush1.bf16.msra.mxu0 %v1141
        %1160 = vmatprep.subr.bf16.mxu0 0
        %1161 = vmatpush1.bf16.msra.mxu0 0
        %1162 = vmatprep.subr.bf16.mxu0 0
        %1163 = vmatpush1.bf16.msra.mxu0 0
        %1164 = vmatprep.subr.bf16.mxu0 0
        %1165 = vmatpush1.bf16.msra.mxu0 0
        %1166 = vmatprep.subr.bf16.mxu0 0
        %1167 = vmatpush1.bf16.msra.mxu0 0
        %1168 = vmatprep.subr.bf16.mxu0 0
        %1169 = vmatpush1.bf16.msra.mxu0 0
        %1170 = vmatprep.subr.bf16.mxu0 0
        %1171 = vmatpush1.bf16.msra.mxu0 0
        %1172 = vmatprep.subr.bf16.mxu0 0
        %1173 = vmatpush1.bf16.msra.mxu0 0
        %1174 = vmatprep.subr.bf16.mxu0 0
        %1175 = vmatpush1.bf16.msra.mxu0 0
        %1176 = vmatprep.subr.bf16.mxu0 0
        %1177 = vmatpush1.bf16.msra.mxu0 0
        %1178 = vmatprep.subr.bf16.mxu0 0
        %1179 = vmatpush1.bf16.msra.mxu0 0
        %1180 = vmatprep.subr.bf16.mxu0 0
        %1181 = vmatpush1.bf16.msra.mxu0 0
        %1182 = vmatprep.subr.bf16.mxu0 0
        %1183 = vmatpush1.bf16.msra.mxu0 0
        %1184 = vmatprep.subr.bf16.mxu0 0
        %1185 = vmatpush1.bf16.msra.mxu0 0
        %1186 = vmatprep.subr.bf16.mxu0 0
        %1187 = vmatpush1.bf16.msra.mxu0 0
        %1188 = vmatprep.mubr.bf16.mxu0 0
        %1189 = vmatmul.mubr.bf16.gmra.mrb[0].mxu0 %v1145
        %v1190 = vpop.f32.mrb[0].mxu0
        %v1191 = vadd.f32 0.0, %v1190
        %v1192 = vpop.f32.mrb[0].mxu0
        %v1193 = vpop.f32.mrb[0].mxu0
        %v1194 = vadd.f32 0.0, %v1193
        %v1195 = vpop.f32.mrb[0].mxu0
        %1196 = vmatprep.mubr.bf16.mxu0 0
        %1197 = vmatmul.mubr.bf16.gmra.mrb[0].mxu0 %v1148
        %v1198 = vpop.f32.mrb[0].mxu0
        %v1199 = vadd.f32 0.0, %v1198
        %v1200 = vpop.f32.mrb[0].mxu0
        %v1201 = vpop.f32.mrb[0].mxu0
        %v1202 = vadd.f32 0.0, %v1201
        %v1203 = vpop.f32.mrb[0].mxu0
        %1204 = vmatprep.mubr.bf16.mxu0 0
        %1205 = vmatmul.mubr.bf16.gmra.mrb[0].mxu0 %v1151
        %v1206 = vpop.f32.mrb[0].mxu0
        %v1207 = vadd.f32 0.0, %v1206
        %v1208 = vpop.f32.mrb[0].mxu0
        %v1209 = vpop.f32.mrb[0].mxu0
        %v1210 = vadd.f32 0.0, %v1209
        %v1211 = vpop.f32.mrb[0].mxu0
        %1212 = vmatprep.mubr.bf16.mxu0 0
        %1213 = vmatmul.mubr.bf16.gmra.mrb[0].mxu0 %v1154
        %v1214 = vpop.f32.mrb[0].mxu0
        %v1215 = vadd.f32 0.0, %v1214
        %v1216 = vpop.f32.mrb[0].mxu0
        %v1217 = vpop.f32.mrb[0].mxu0
        %v1218 = vadd.f32 0.0, %v1217
        %v1219 = vpop.f32.mrb[0].mxu0
        %1220 = vdwg.mxu0
        %v1221 = vadd.f32 %v1107, %v1191
        %v1222 = vadd.f32 %v1108, %v1194
        %v1223 = vadd.f32 %v1109, %v1199
        %v1224 = vadd.f32 %v1110, %v1202
        %v1225 = vadd.f32 %v1111, %v1207
        %v1226 = vadd.f32 %v1112, %v1210
        %v1227 = vadd.f32 %v1113, %v1215
        %v1228 = vadd.f32 %v1114, %v1218
        %v1229 = vld [vmem:[%s781 + $0x1] sm:$0xff]
        %v1230 = vld [vmem:[%s781 + $0x11] sm:$0xff]
        %v1231 = vld [vmem:[%s781 + $0x21] sm:$0xff]
        %v1232 = vld [vmem:[%s781 + $0x31] sm:$0xff]
        %v1233 = vld [vmem:[%s781 + $0x41] sm:$0xff]
        %v1234 = vld [vmem:[%s781 + $0x51] sm:$0xff]
        %v1235 = vld [vmem:[%s781 + $0x61] sm:$0xff]
        %v1236 = vld [vmem:[%s781 + $0x71] sm:$0xff]
        %v1237 = vpack.c.bf16 %v1230, %v1229
        %v1238 = vpack.c.bf16 %v1232, %v1231
        %v1239 = vpack.c.bf16 %v1234, %v1233
        %v1240 = vpack.c.bf16 %v1236, %v1235
        %s1241 = scalar_lea.vmem %s3, 64
        %v1242 = vld [vmem:[%s1241] sm:$0xf]
        %v1243 = vld [vmem:[%s1241 + $0x4] sm:$0xf]
        %v1244 = vld [vmem:[%s1241 + $0x8] sm:$0xf]
        %v1245 = vld [vmem:[%s1241 + $0xc] sm:$0xf]
        %v1250 = vunpack.c.l.b16 %v1242
        %v1251 = vunpack.c.l.b16 %v1243
        %v1252 = vunpack.c.l.b16 %v1244
        %v1253 = vunpack.c.l.b16 %v1245
        %v1254 = vpack.c.b16 %v1251, %v1250
        %v1255 = vpack.c.b16 %v1253, %v1252
        %v1259 = vsel %vm759, %v1237, 0
        %v1262 = vsel %vm759, %v1238, 0
        %v1265 = vsel %vm759, %v1239, 0
        %v1268 = vsel %vm759, %v1240, 0
        %1270 = vmatprep.subr.bf16.mxu0 0
        %1271 = vmatpush1.bf16.msra.mxu0 %v1254
        %1272 = vmatprep.subr.bf16.mxu0 0
        %1273 = vmatpush1.bf16.msra.mxu0 %v1255
        %1274 = vmatprep.subr.bf16.mxu0 0
        %1275 = vmatpush1.bf16.msra.mxu0 0
        %1276 = vmatprep.subr.bf16.mxu0 0
        %1277 = vmatpush1.bf16.msra.mxu0 0
        %1278 = vmatprep.subr.bf16.mxu0 0
        %1279 = vmatpush1.bf16.msra.mxu0 0
        %1280 = vmatprep.subr.bf16.mxu0 0
        %1281 = vmatpush1.bf16.msra.mxu0 0
        %1282 = vmatprep.subr.bf16.mxu0 0
        %1283 = vmatpush1.bf16.msra.mxu0 0
        %1284 = vmatprep.subr.bf16.mxu0 0
        %1285 = vmatpush1.bf16.msra.mxu0 0
        %1286 = vmatprep.subr.bf16.mxu0 0
        %1287 = vmatpush1.bf16.msra.mxu0 0
        %1288 = vmatprep.subr.bf16.mxu0 0
        %1289 = vmatpush1.bf16.msra.mxu0 0
        %1290 = vmatprep.subr.bf16.mxu0 0
        %1291 = vmatpush1.bf16.msra.mxu0 0
        %1292 = vmatprep.subr.bf16.mxu0 0
        %1293 = vmatpush1.bf16.msra.mxu0 0
        %1294 = vmatprep.subr.bf16.mxu0 0
        %1295 = vmatpush1.bf16.msra.mxu0 0
        %1296 = vmatprep.subr.bf16.mxu0 0
        %1297 = vmatpush1.bf16.msra.mxu0 0
        %1298 = vmatprep.subr.bf16.mxu0 0
        %1299 = vmatpush1.bf16.msra.mxu0 0
        %1300 = vmatprep.subr.bf16.mxu0 0
        %1301 = vmatpush1.bf16.msra.mxu0 0
        %1302 = vmatprep.mubr.bf16.mxu0 0
        %1303 = vmatmul.mubr.bf16.gmra.mrb[0].mxu0 %v1259
        %v1304 = vpop.f32.mrb[0].mxu0
        %v1305 = vadd.f32 0.0, %v1304
        %v1306 = vpop.f32.mrb[0].mxu0
        %v1307 = vpop.f32.mrb[0].mxu0
        %v1308 = vadd.f32 0.0, %v1307
        %v1309 = vpop.f32.mrb[0].mxu0
        %1310 = vmatprep.mubr.bf16.mxu0 0
        %1311 = vmatmul.mubr.bf16.gmra.mrb[0].mxu0 %v1262
        %v1312 = vpop.f32.mrb[0].mxu0
        %v1313 = vadd.f32 0.0, %v1312
        %v1314 = vpop.f32.mrb[0].mxu0
        %v1315 = vpop.f32.mrb[0].mxu0
        %v1316 = vadd.f32 0.0, %v1315
        %v1317 = vpop.f32.mrb[0].mxu0
        %1318 = vmatprep.mubr.bf16.mxu0 0
        %1319 = vmatmul.mubr.bf16.gmra.mrb[0].mxu0 %v1265
        %v1320 = vpop.f32.mrb[0].mxu0
        %v1321 = vadd.f32 0.0, %v1320
        %v1322 = vpop.f32.mrb[0].mxu0
        %v1323 = vpop.f32.mrb[0].mxu0
        %v1324 = vadd.f32 0.0, %v1323
        %v1325 = vpop.f32.mrb[0].mxu0
        %1326 = vmatprep.mubr.bf16.mxu0 0
        %1327 = vmatmul.mubr.bf16.gmra.mrb[0].mxu0 %v1268
        %v1328 = vpop.f32.mrb[0].mxu0
        %v1329 = vadd.f32 0.0, %v1328
        %v1330 = vpop.f32.mrb[0].mxu0
        %v1331 = vpop.f32.mrb[0].mxu0
        %v1332 = vadd.f32 0.0, %v1331
        %v1333 = vpop.f32.mrb[0].mxu0
        %1334 = vdwg.mxu0
        %v1335 = vadd.f32 %v1221, %v1305
        %v1336 = vadd.f32 %v1222, %v1308
        %v1337 = vadd.f32 %v1223, %v1313
        %v1338 = vadd.f32 %v1224, %v1316
        %v1339 = vadd.f32 %v1225, %v1321
        %v1340 = vadd.f32 %v1226, %v1324
        %v1341 = vadd.f32 %v1227, %v1329
        %v1342 = vadd.f32 %v1228, %v1332
        %v1343 = vld [vmem:[%s781 + $0x2] sm:$0xff]
        %v1344 = vld [vmem:[%s781 + $0x12] sm:$0xff]
        %v1345 = vld [vmem:[%s781 + $0x22] sm:$0xff]
        %v1346 = vld [vmem:[%s781 + $0x32] sm:$0xff]
        %v1347 = vld [vmem:[%s781 + $0x42] sm:$0xff]
        %v1348 = vld [vmem:[%s781 + $0x52] sm:$0xff]
        %v1349 = vld [vmem:[%s781 + $0x62] sm:$0xff]
        %v1350 = vld [vmem:[%s781 + $0x72] sm:$0xff]
        %v1351 = vpack.c.bf16 %v1344, %v1343
        %v1352 = vpack.c.bf16 %v1346, %v1345
        %v1353 = vpack.c.bf16 %v1348, %v1347
        %v1354 = vpack.c.bf16 %v1350, %v1349
        %s1355 = scalar_lea.vmem %s3, 80
        %v1356 = vld [vmem:[%s1355] sm:$0xf]
        %v1357 = vld [vmem:[%s1355 + $0x4] sm:$0xf]
        %v1358 = vld [vmem:[%s1355 + $0x8] sm:$0xf]
        %v1359 = vld [vmem:[%s1355 + $0xc] sm:$0xf]
        %v1364 = vunpack.c.l.b16 %v1356
        %v1365 = vunpack.c.l.b16 %v1357
        %v1366 = vunpack.c.l.b16 %v1358
        %v1367 = vunpack.c.l.b16 %v1359
        %v1368 = vpack.c.b16 %v1365, %v1364
        %v1369 = vpack.c.b16 %v1367, %v1366
        %v1373 = vsel %vm759, %v1351, 0
        %v1376 = vsel %vm759, %v1352, 0
        %v1379 = vsel %vm759, %v1353, 0
        %v1382 = vsel %vm759, %v1354, 0
        %1384 = vmatprep.subr.bf16.mxu0 0
        %1385 = vmatpush1.bf16.msra.mxu0 %v1368
        %1386 = vmatprep.subr.bf16.mxu0 0
        %1387 = vmatpush1.bf16.msra.mxu0 %v1369
        %1388 = vmatprep.subr.bf16.mxu0 0
        %1389 = vmatpush1.bf16.msra.mxu0 0
        %1390 = vmatprep.subr.bf16.mxu0 0
        %1391 = vmatpush1.bf16.msra.mxu0 0
        %1392 = vmatprep.subr.bf16.mxu0 0
        %1393 = vmatpush1.bf16.msra.mxu0 0
        %1394 = vmatprep.subr.bf16.mxu0 0
        %1395 = vmatpush1.bf16.msra.mxu0 0
        %1396 = vmatprep.subr.bf16.mxu0 0
        %1397 = vmatpush1.bf16.msra.mxu0 0
        %1398 = vmatprep.subr.bf16.mxu0 0
        %1399 = vmatpush1.bf16.msra.mxu0 0
        %1400 = vmatprep.subr.bf16.mxu0 0
        %1401 = vmatpush1.bf16.msra.mxu0 0
        %1402 = vmatprep.subr.bf16.mxu0 0
        %1403 = vmatpush1.bf16.msra.mxu0 0
        %1404 = vmatprep.subr.bf16.mxu0 0
        %1405 = vmatpush1.bf16.msra.mxu0 0
        %1406 = vmatprep.subr.bf16.mxu0 0
        %1407 = vmatpush1.bf16.msra.mxu0 0
        %1408 = vmatprep.subr.bf16.mxu0 0
        %1409 = vmatpush1.bf16.msra.mxu0 0
        %1410 = vmatprep.subr.bf16.mxu0 0
        %1411 = vmatpush1.bf16.msra.mxu0 0
        %1412 = vmatprep.subr.bf16.mxu0 0
        %1413 = vmatpush1.bf16.msra.mxu0 0
        %1414 = vmatprep.subr.bf16.mxu0 0
        %1415 = vmatpush1.bf16.msra.mxu0 0
        %1416 = vmatprep.mubr.bf16.mxu0 0
        %1417 = vmatmul.mubr.bf16.gmra.mrb[0].mxu0 %v1373
        %v1418 = vpop.f32.mrb[0].mxu0
        %v1419 = vadd.f32 0.0, %v1418
        %v1420 = vpop.f32.mrb[0].mxu0
        %v1421 = vpop.f32.mrb[0].mxu0
        %v1422 = vadd.f32 0.0, %v1421
        %v1423 = vpop.f32.mrb[0].mxu0
        %1424 = vmatprep.mubr.bf16.mxu0 0
        %1425 = vmatmul.mubr.bf16.gmra.mrb[0].mxu0 %v1376
        %v1426 = vpop.f32.mrb[0].mxu0
        %v1427 = vadd.f32 0.0, %v1426
        %v1428 = vpop.f32.mrb[0].mxu0
        %v1429 = vpop.f32.mrb[0].mxu0
        %v1430 = vadd.f32 0.0, %v1429
        %v1431 = vpop.f32.mrb[0].mxu0
        %1432 = vmatprep.mubr.bf16.mxu0 0
        %1433 = vmatmul.mubr.bf16.gmra.mrb[0].mxu0 %v1379
        %v1434 = vpop.f32.mrb[0].mxu0
        %v1435 = vadd.f32 0.0, %v1434
        %v1436 = vpop.f32.mrb[0].mxu0
        %v1437 = vpop.f32.mrb[0].mxu0
        %v1438 = vadd.f32 0.0, %v1437
        %v1439 = vpop.f32.mrb[0].mxu0
        %1440 = vmatprep.mubr.bf16.mxu0 0
        %1441 = vmatmul.mubr.bf16.gmra.mrb[0].mxu0 %v1382
        %v1442 = vpop.f32.mrb[0].mxu0
        %v1443 = vadd.f32 0.0, %v1442
        %v1444 = vpop.f32.mrb[0].mxu0
        %v1445 = vpop.f32.mrb[0].mxu0
        %v1446 = vadd.f32 0.0, %v1445
        %v1447 = vpop.f32.mrb[0].mxu0
        %1448 = vdwg.mxu0
        %v1449 = vadd.f32 %v1335, %v1419
        %v1450 = vadd.f32 %v1336, %v1422
        %v1451 = vadd.f32 %v1337, %v1427
        %v1452 = vadd.f32 %v1338, %v1430
        %v1453 = vadd.f32 %v1339, %v1435
        %v1454 = vadd.f32 %v1340, %v1438
        %v1455 = vadd.f32 %v1341, %v1443
        %v1456 = vadd.f32 %v1342, %v1446
        %s1457 = scalar_lea.vmem [#allocation2], 32
        %v1458 = vld [vmem:[%s1457] sm:$0xff]
        %v1459 = vld [vmem:[%s1457 + $0x10] sm:$0xff]
        %v1460 = vld [vmem:[%s1457 + $0x20] sm:$0xff]
        %v1461 = vld [vmem:[%s1457 + $0x30] sm:$0xff]
        %v1462 = vld [vmem:[%s1457 + $0x40] sm:$0xff]
        %v1463 = vld [vmem:[%s1457 + $0x50] sm:$0xff]
        %v1464 = vld [vmem:[%s1457 + $0x60] sm:$0xff]
        %v1465 = vld [vmem:[%s1457 + $0x70] sm:$0xff]
        %v1466 = vpack.c.bf16 %v1459, %v1458
        %v1467 = vpack.c.bf16 %v1461, %v1460
        %v1468 = vpack.c.bf16 %v1463, %v1462
        %v1469 = vpack.c.bf16 %v1465, %v1464
        %s1470 = scalar_lea.vmem %s3, 96
        %v1471 = vld [vmem:[%s1470] sm:$0xf]
        %v1472 = vld [vmem:[%s1470 + $0x4] sm:$0xf]
        %v1473 = vld [vmem:[%s1470 + $0x8] sm:$0xf]
        %v1474 = vld [vmem:[%s1470 + $0xc] sm:$0xf]
        %v1479 = vunpack.c.l.b16 %v1471
        %v1480 = vunpack.c.l.b16 %v1472
        %v1481 = vunpack.c.l.b16 %v1473
        %v1482 = vunpack.c.l.b16 %v1474
        %v1483 = vpack.c.b16 %v1480, %v1479
        %v1484 = vpack.c.b16 %v1482, %v1481
        %v1488 = vsel %vm759, %v1466, 0
        %v1491 = vsel %vm759, %v1467, 0
        %v1494 = vsel %vm759, %v1468, 0
        %v1497 = vsel %vm759, %v1469, 0
        %1499 = vmatprep.subr.bf16.mxu0 0
        %1500 = vmatpush1.bf16.msra.mxu0 %v1483
        %1501 = vmatprep.subr.bf16.mxu0 0
        %1502 = vmatpush1.bf16.msra.mxu0 %v1484
        %1503 = vmatprep.subr.bf16.mxu0 0
        %1504 = vmatpush1.bf16.msra.mxu0 0
        %1505 = vmatprep.subr.bf16.mxu0 0
        %1506 = vmatpush1.bf16.msra.mxu0 0
        %1507 = vmatprep.subr.bf16.mxu0 0
        %1508 = vmatpush1.bf16.msra.mxu0 0
        %1509 = vmatprep.subr.bf16.mxu0 0
        %1510 = vmatpush1.bf16.msra.mxu0 0
        %1511 = vmatprep.subr.bf16.mxu0 0
        %1512 = vmatpush1.bf16.msra.mxu0 0
        %1513 = vmatprep.subr.bf16.mxu0 0
        %1514 = vmatpush1.bf16.msra.mxu0 0
        %1515 = vmatprep.subr.bf16.mxu0 0
        %1516 = vmatpush1.bf16.msra.mxu0 0
        %1517 = vmatprep.subr.bf16.mxu0 0
        %1518 = vmatpush1.bf16.msra.mxu0 0
        %1519 = vmatprep.subr.bf16.mxu0 0
        %1520 = vmatpush1.bf16.msra.mxu0 0
        %1521 = vmatprep.subr.bf16.mxu0 0
        %1522 = vmatpush1.bf16.msra.mxu0 0
        %1523 = vmatprep.subr.bf16.mxu0 0
        %1524 = vmatpush1.bf16.msra.mxu0 0
        %1525 = vmatprep.subr.bf16.mxu0 0
        %1526 = vmatpush1.bf16.msra.mxu0 0
        %1527 = vmatprep.subr.bf16.mxu0 0
        %1528 = vmatpush1.bf16.msra.mxu0 0
        %1529 = vmatprep.subr.bf16.mxu0 0
        %1530 = vmatpush1.bf16.msra.mxu0 0
        %1531 = vmatprep.mubr.bf16.mxu0 0
        %1532 = vmatmul.mubr.bf16.gmra.mrb[0].mxu0 %v1488
        %v1533 = vpop.f32.mrb[0].mxu0
        %v1534 = vadd.f32 0.0, %v1533
        %v1535 = vpop.f32.mrb[0].mxu0
        %v1536 = vpop.f32.mrb[0].mxu0
        %v1537 = vadd.f32 0.0, %v1536
        %v1538 = vpop.f32.mrb[0].mxu0
        %1539 = vmatprep.mubr.bf16.mxu0 0
        %1540 = vmatmul.mubr.bf16.gmra.mrb[0].mxu0 %v1491
        %v1541 = vpop.f32.mrb[0].mxu0
        %v1542 = vadd.f32 0.0, %v1541
        %v1543 = vpop.f32.mrb[0].mxu0
        %v1544 = vpop.f32.mrb[0].mxu0
        %v1545 = vadd.f32 0.0, %v1544
        %v1546 = vpop.f32.mrb[0].mxu0
        %1547 = vmatprep.mubr.bf16.mxu0 0
        %1548 = vmatmul.mubr.bf16.gmra.mrb[0].mxu0 %v1494
        %v1549 = vpop.f32.mrb[0].mxu0
        %v1550 = vadd.f32 0.0, %v1549
        %v1551 = vpop.f32.mrb[0].mxu0
        %v1552 = vpop.f32.mrb[0].mxu0
        %v1553 = vadd.f32 0.0, %v1552
        %v1554 = vpop.f32.mrb[0].mxu0
        %1555 = vmatprep.mubr.bf16.mxu0 0
        %1556 = vmatmul.mubr.bf16.gmra.mrb[0].mxu0 %v1497
        %v1557 = vpop.f32.mrb[0].mxu0
        %v1558 = vadd.f32 0.0, %v1557
        %v1559 = vpop.f32.mrb[0].mxu0
        %v1560 = vpop.f32.mrb[0].mxu0
        %v1561 = vadd.f32 0.0, %v1560
        %v1562 = vpop.f32.mrb[0].mxu0
        %1563 = vdwg.mxu0
        %v1564 = vadd.f32 %v1449, %v1534
        %v1565 = vadd.f32 %v1450, %v1537
        %v1566 = vadd.f32 %v1451, %v1542
        %v1567 = vadd.f32 %v1452, %v1545
        %v1568 = vadd.f32 %v1453, %v1550
        %v1569 = vadd.f32 %v1454, %v1553
        %v1570 = vadd.f32 %v1455, %v1558
        %v1571 = vadd.f32 %v1456, %v1561
        %v1572 = vld [vmem:[%s1457 + $0x1] sm:$0xff]
        %v1573 = vld [vmem:[%s1457 + $0x11] sm:$0xff]
        %v1574 = vld [vmem:[%s1457 + $0x21] sm:$0xff]
        %v1575 = vld [vmem:[%s1457 + $0x31] sm:$0xff]
        %v1576 = vld [vmem:[%s1457 + $0x41] sm:$0xff]
        %v1577 = vld [vmem:[%s1457 + $0x51] sm:$0xff]
        %v1578 = vld [vmem:[%s1457 + $0x61] sm:$0xff]
        %v1579 = vld [vmem:[%s1457 + $0x71] sm:$0xff]
        %v1580 = vpack.c.bf16 %v1573, %v1572
        %v1581 = vpack.c.bf16 %v1575, %v1574
        %v1582 = vpack.c.bf16 %v1577, %v1576
        %v1583 = vpack.c.bf16 %v1579, %v1578
        %s1584 = scalar_lea.vmem %s3, 112
        %v1585 = vld [vmem:[%s1584] sm:$0xf]
        %v1586 = vld [vmem:[%s1584 + $0x4] sm:$0xf]
        %v1587 = vld [vmem:[%s1584 + $0x8] sm:$0xf]
        %v1588 = vld [vmem:[%s1584 + $0xc] sm:$0xf]
        %v1593 = vunpack.c.l.b16 %v1585
        %v1594 = vunpack.c.l.b16 %v1586
        %v1595 = vunpack.c.l.b16 %v1587
        %v1596 = vunpack.c.l.b16 %v1588
        %v1597 = vpack.c.b16 %v1594, %v1593
        %v1598 = vpack.c.b16 %v1596, %v1595
        %v1602 = vsel %vm759, %v1580, 0
        %v1605 = vsel %vm759, %v1581, 0
        %v1608 = vsel %vm759, %v1582, 0
        %v1611 = vsel %vm759, %v1583, 0
        %1613 = vmatprep.subr.bf16.mxu0 0
        %1614 = vmatpush1.bf16.msra.mxu0 %v1597
        %1615 = vmatprep.subr.bf16.mxu0 0
        %1616 = vmatpush1.bf16.msra.mxu0 %v1598
        %1617 = vmatprep.subr.bf16.mxu0 0
        %1618 = vmatpush1.bf16.msra.mxu0 0
        %1619 = vmatprep.subr.bf16.mxu0 0
        %1620 = vmatpush1.bf16.msra.mxu0 0
        %1621 = vmatprep.subr.bf16.mxu0 0
        %1622 = vmatpush1.bf16.msra.mxu0 0
        %1623 = vmatprep.subr.bf16.mxu0 0
        %1624 = vmatpush1.bf16.msra.mxu0 0
        %1625 = vmatprep.subr.bf16.mxu0 0
        %1626 = vmatpush1.bf16.msra.mxu0 0
        %1627 = vmatprep.subr.bf16.mxu0 0
        %1628 = vmatpush1.bf16.msra.mxu0 0
        %1629 = vmatprep.subr.bf16.mxu0 0
        %1630 = vmatpush1.bf16.msra.mxu0 0
        %1631 = vmatprep.subr.bf16.mxu0 0
        %1632 = vmatpush1.bf16.msra.mxu0 0
        %1633 = vmatprep.subr.bf16.mxu0 0
        %1634 = vmatpush1.bf16.msra.mxu0 0
        %1635 = vmatprep.subr.bf16.mxu0 0
        %1636 = vmatpush1.bf16.msra.mxu0 0
        %1637 = vmatprep.subr.bf16.mxu0 0
        %1638 = vmatpush1.bf16.msra.mxu0 0
        %1639 = vmatprep.subr.bf16.mxu0 0
        %1640 = vmatpush1.bf16.msra.mxu0 0
        %1641 = vmatprep.subr.bf16.mxu0 0
        %1642 = vmatpush1.bf16.msra.mxu0 0
        %1643 = vmatprep.subr.bf16.mxu0 0
        %1644 = vmatpush1.bf16.msra.mxu0 0
        %1645 = vmatprep.mubr.bf16.mxu0 0
        %1646 = vmatmul.mubr.bf16.gmra.mrb[0].mxu0 %v1602
        %v1647 = vpop.f32.mrb[0].mxu0
        %v1648 = vadd.f32 0.0, %v1647
        %v1649 = vpop.f32.mrb[0].mxu0
        %v1650 = vpop.f32.mrb[0].mxu0
        %v1651 = vadd.f32 0.0, %v1650
        %v1652 = vpop.f32.mrb[0].mxu0
        %1653 = vmatprep.mubr.bf16.mxu0 0
        %1654 = vmatmul.mubr.bf16.gmra.mrb[0].mxu0 %v1605
        %v1655 = vpop.f32.mrb[0].mxu0
        %v1656 = vadd.f32 0.0, %v1655
        %v1657 = vpop.f32.mrb[0].mxu0
        %v1658 = vpop.f32.mrb[0].mxu0
        %v1659 = vadd.f32 0.0, %v1658
        %v1660 = vpop.f32.mrb[0].mxu0
        %1661 = vmatprep.mubr.bf16.mxu0 0
        %1662 = vmatmul.mubr.bf16.gmra.mrb[0].mxu0 %v1608
        %v1663 = vpop.f32.mrb[0].mxu0
        %v1664 = vadd.f32 0.0, %v1663
        %v1665 = vpop.f32.mrb[0].mxu0
        %v1666 = vpop.f32.mrb[0].mxu0
        %v1667 = vadd.f32 0.0, %v1666
        %v1668 = vpop.f32.mrb[0].mxu0
        %1669 = vmatprep.mubr.bf16.mxu0 0
        %1670 = vmatmul.mubr.bf16.gmra.mrb[0].mxu0 %v1611
        %v1671 = vpop.f32.mrb[0].mxu0
        %v1672 = vadd.f32 0.0, %v1671
        %v1673 = vpop.f32.mrb[0].mxu0
        %v1674 = vpop.f32.mrb[0].mxu0
        %v1675 = vadd.f32 0.0, %v1674
        %v1676 = vpop.f32.mrb[0].mxu0
        %1677 = vdwg.mxu0
        %v1678 = vadd.f32 %v1564, %v1648
        %v1679 = vadd.f32 %v1565, %v1651
        %v1680 = vadd.f32 %v1566, %v1656
        %v1681 = vadd.f32 %v1567, %v1659
        %v1682 = vadd.f32 %v1568, %v1664
        %v1683 = vadd.f32 %v1569, %v1667
        %v1684 = vadd.f32 %v1570, %v1672
        %v1685 = vadd.f32 %v1571, %v1675
        %v1686 = vld [vmem:[%s1457 + $0x2] sm:$0xff]
        %v1687 = vld [vmem:[%s1457 + $0x12] sm:$0xff]
        %v1688 = vld [vmem:[%s1457 + $0x22] sm:$0xff]
        %v1689 = vld [vmem:[%s1457 + $0x32] sm:$0xff]
        %v1690 = vld [vmem:[%s1457 + $0x42] sm:$0xff]
        %v1691 = vld [vmem:[%s1457 + $0x52] sm:$0xff]
        %v1692 = vld [vmem:[%s1457 + $0x62] sm:$0xff]
        %v1693 = vld [vmem:[%s1457 + $0x72] sm:$0xff]
        %v1694 = vpack.c.bf16 %v1687, %v1686
        %v1695 = vpack.c.bf16 %v1689, %v1688
        %v1696 = vpack.c.bf16 %v1691, %v1690
        %v1697 = vpack.c.bf16 %v1693, %v1692
        %s1698 = scalar_lea.vmem %s3, 128
        %v1699 = vld [vmem:[%s1698] sm:$0xf]
        %v1700 = vld [vmem:[%s1698 + $0x4] sm:$0xf]
        %v1701 = vld [vmem:[%s1698 + $0x8] sm:$0xf]
        %v1702 = vld [vmem:[%s1698 + $0xc] sm:$0xf]
        %v1707 = vunpack.c.l.b16 %v1699
        %v1708 = vunpack.c.l.b16 %v1700
        %v1709 = vunpack.c.l.b16 %v1701
        %v1710 = vunpack.c.l.b16 %v1702
        %v1711 = vpack.c.b16 %v1708, %v1707
        %v1712 = vpack.c.b16 %v1710, %v1709
        %v1716 = vsel %vm759, %v1694, 0
        %v1719 = vsel %vm759, %v1695, 0
        %v1722 = vsel %vm759, %v1696, 0
        %v1725 = vsel %vm759, %v1697, 0
        %1727 = vmatprep.subr.bf16.mxu0 0
        %1728 = vmatpush1.bf16.msra.mxu0 %v1711
        %1729 = vmatprep.subr.bf16.mxu0 0
        %1730 = vmatpush1.bf16.msra.mxu0 %v1712
        %1731 = vmatprep.subr.bf16.mxu0 0
        %1732 = vmatpush1.bf16.msra.mxu0 0
        %1733 = vmatprep.subr.bf16.mxu0 0
        %1734 = vmatpush1.bf16.msra.mxu0 0
        %1735 = vmatprep.subr.bf16.mxu0 0
        %1736 = vmatpush1.bf16.msra.mxu0 0
        %1737 = vmatprep.subr.bf16.mxu0 0
        %1738 = vmatpush1.bf16.msra.mxu0 0
        %1739 = vmatprep.subr.bf16.mxu0 0
        %1740 = vmatpush1.bf16.msra.mxu0 0
        %1741 = vmatprep.subr.bf16.mxu0 0
        %1742 = vmatpush1.bf16.msra.mxu0 0
        %1743 = vmatprep.subr.bf16.mxu0 0
        %1744 = vmatpush1.bf16.msra.mxu0 0
        %1745 = vmatprep.subr.bf16.mxu0 0
        %1746 = vmatpush1.bf16.msra.mxu0 0
        %1747 = vmatprep.subr.bf16.mxu0 0
        %1748 = vmatpush1.bf16.msra.mxu0 0
        %1749 = vmatprep.subr.bf16.mxu0 0
        %1750 = vmatpush1.bf16.msra.mxu0 0
        %1751 = vmatprep.subr.bf16.mxu0 0
        %1752 = vmatpush1.bf16.msra.mxu0 0
        %1753 = vmatprep.subr.bf16.mxu0 0
        %1754 = vmatpush1.bf16.msra.mxu0 0
        %1755 = vmatprep.subr.bf16.mxu0 0
        %1756 = vmatpush1.bf16.msra.mxu0 0
        %1757 = vmatprep.subr.bf16.mxu0 0
        %1758 = vmatpush1.bf16.msra.mxu0 0
        %1759 = vmatprep.mubr.bf16.mxu0 0
        %1760 = vmatmul.mubr.bf16.gmra.mrb[0].mxu0 %v1716
        %v1761 = vpop.f32.mrb[0].mxu0
        %v1762 = vadd.f32 0.0, %v1761
        %v1763 = vpop.f32.mrb[0].mxu0
        %v1764 = vpop.f32.mrb[0].mxu0
        %v1765 = vadd.f32 0.0, %v1764
        %v1766 = vpop.f32.mrb[0].mxu0
        %1767 = vmatprep.mubr.bf16.mxu0 0
        %1768 = vmatmul.mubr.bf16.gmra.mrb[0].mxu0 %v1719
        %v1769 = vpop.f32.mrb[0].mxu0
        %v1770 = vadd.f32 0.0, %v1769
        %v1771 = vpop.f32.mrb[0].mxu0
        %v1772 = vpop.f32.mrb[0].mxu0
        %v1773 = vadd.f32 0.0, %v1772
        %v1774 = vpop.f32.mrb[0].mxu0
        %1775 = vmatprep.mubr.bf16.mxu0 0
        %1776 = vmatmul.mubr.bf16.gmra.mrb[0].mxu0 %v1722
        %v1777 = vpop.f32.mrb[0].mxu0
        %v1778 = vadd.f32 0.0, %v1777
        %v1779 = vpop.f32.mrb[0].mxu0
        %v1780 = vpop.f32.mrb[0].mxu0
        %v1781 = vadd.f32 0.0, %v1780
        %v1782 = vpop.f32.mrb[0].mxu0
        %1783 = vmatprep.mubr.bf16.mxu0 0
        %1784 = vmatmul.mubr.bf16.gmra.mrb[0].mxu0 %v1725
        %v1785 = vpop.f32.mrb[0].mxu0
        %v1786 = vadd.f32 0.0, %v1785
        %v1787 = vpop.f32.mrb[0].mxu0
        %v1788 = vpop.f32.mrb[0].mxu0
        %v1789 = vadd.f32 0.0, %v1788
        %v1790 = vpop.f32.mrb[0].mxu0
        %1791 = vdwg.mxu0
        %v1792 = vadd.f32 %v1678, %v1762
        %v1793 = vadd.f32 %v1679, %v1765
        %v1794 = vadd.f32 %v1680, %v1770
        %v1795 = vadd.f32 %v1681, %v1773
        %v1796 = vadd.f32 %v1682, %v1778
        %v1797 = vadd.f32 %v1683, %v1781
        %v1798 = vadd.f32 %v1684, %v1786
        %v1799 = vadd.f32 %v1685, %v1789
        %v1800 = vld [vmem:[%s4] sm:$0x1]
        %v1802 = vlaneseq
        %v1803 = vshrl.u32 %v1802, 7
        %v1804 = vsub.s32 0, %v1803
        %v1805 = vrot.slane %v1800, %v1804
        %v1807 = vadd.f32 %v1792, %v1805
        %v1808 = vadd.f32 %v1793, %v1805
        %v1809 = vadd.f32 %v1794, %v1805
        %v1810 = vadd.f32 %v1795, %v1805
        %v1811 = vadd.f32 %v1796, %v1805
        %v1812 = vadd.f32 %v1797, %v1805
        %v1813 = vadd.f32 %v1798, %v1805
        %v1814 = vadd.f32 %v1799, %v1805
        %v1815 = vmax.f32 %v1807, 0.0
        %v1816 = vmax.f32 %v1808, 0.0
        %v1817 = vmax.f32 %v1809, 0.0
        %v1818 = vmax.f32 %v1810, 0.0
        %v1819 = vmax.f32 %v1811, 0.0
        %v1820 = vmax.f32 %v1812, 0.0
        %v1821 = vmax.f32 %v1813, 0.0
        %v1822 = vmax.f32 %v1814, 0.0
        %vm1823 = vcmask 523264
        %1824 = vst.msk [vmem:[#allocation3] sm:$0xff] %vm1823, 0.0
        %vm1825 = vcmask 517120
        %1826 = vst.msk [vmem:[#allocation3 + $0x8] sm:$0x3] %vm1825, 0.0
        %1827 = vst.msk [vmem:[#allocation3 + $0x10] sm:$0xff] %vm1823, 0.0
        %1828 = vst.msk [vmem:[#allocation3 + $0x18] sm:$0x3] %vm1825, 0.0
        %1829 = vst.msk [vmem:[#allocation3 + $0x20] sm:$0xff] %vm1823, 0.0
        %1830 = vst.msk [vmem:[#allocation3 + $0x28] sm:$0x3] %vm1825, 0.0
        %1831 = vst.msk [vmem:[#allocation3 + $0x30] sm:$0xff] %vm1823, 0.0
        %1832 = vst.msk [vmem:[#allocation3 + $0x38] sm:$0x3] %vm1825, 0.0
        %1833 = vst.msk [vmem:[#allocation3 + $0x40] sm:$0xff] %vm1823, 0.0
        %1834 = vst.msk [vmem:[#allocation3 + $0x48] sm:$0x3] %vm1825, 0.0
        %1835 = vst.msk [vmem:[#allocation3 + $0x50] sm:$0xff] %vm1823, 0.0
        %1836 = vst.msk [vmem:[#allocation3 + $0x58] sm:$0x3] %vm1825, 0.0
        %1837 = vst.msk [vmem:[#allocation3 + $0x60] sm:$0xff] %vm1823, 0.0
        %1838 = vst.msk [vmem:[#allocation3 + $0x68] sm:$0x3] %vm1825, 0.0
        %1839 = vst.msk [vmem:[#allocation3 + $0x70] sm:$0xff] %vm1823, 0.0
        %1840 = vst.msk [vmem:[#allocation3 + $0x78] sm:$0x3] %vm1825, 0.0
        %1841 = vst.msk [vmem:[#allocation3 + $0x80] sm:$0xff] %vm1823, 0.0
        %1842 = vst.msk [vmem:[#allocation3 + $0x88] sm:$0x3] %vm1825, 0.0
        %1843 = vst.msk [vmem:[#allocation3 + $0x90] sm:$0xff] %vm1823, 0.0
        %1844 = vst.msk [vmem:[#allocation3 + $0x98] sm:$0x3] %vm1825, 0.0
        %s1845 = scalar_lea.vmem [#allocation3], 16
        %1846 = vst.msk [vmem:[%s1845 + $0x1] sm:$0xff] %vm1823, %v1815
        %1847 = vst.msk [vmem:[%s1845 + $0x11] sm:$0xff] %vm1823, %v1816
        %1848 = vst.msk [vmem:[%s1845 + $0x21] sm:$0xff] %vm1823, %v1817
        %1849 = vst.msk [vmem:[%s1845 + $0x31] sm:$0xff] %vm1823, %v1818
        %1850 = vst.msk [vmem:[%s1845 + $0x41] sm:$0xff] %vm1823, %v1819
        %1851 = vst.msk [vmem:[%s1845 + $0x51] sm:$0xff] %vm1823, %v1820
        %1852 = vst.msk [vmem:[%s1845 + $0x61] sm:$0xff] %vm1823, %v1821
        %1853 = vst.msk [vmem:[%s1845 + $0x71] sm:$0xff] %vm1823, %v1822
        %v1854 = vld [vmem:[#allocation3] sm:$0xff]
        %v1855 = vld [vmem:[#allocation3 + $0x10] sm:$0xff]
        %v1856 = vld [vmem:[#allocation3 + $0x20] sm:$0xff]
        %v1857 = vld [vmem:[#allocation3 + $0x30] sm:$0xff]
        %v1858 = vld [vmem:[#allocation3 + $0x40] sm:$0xff]
        %v1859 = vld [vmem:[#allocation3 + $0x50] sm:$0xff]
        %v1860 = vld [vmem:[#allocation3 + $0x60] sm:$0xff]
        %v1861 = vld [vmem:[#allocation3 + $0x70] sm:$0xff]
        %v1862 = vld [vmem:[%s5] sm:$0x1]
        %v1864 = vlaneseq
        %v1865 = vshrl.u32 %v1864, 7
        %v1866 = vsub.s32 0, %v1865
        %v1867 = vrot.slane %v1862, %v1866
        %v1869 = vmul.f32 %v1854, %v1867
        %v1870 = vmul.f32 %v1855, %v1867
        %v1871 = vmul.f32 %v1856, %v1867
        %v1872 = vmul.f32 %v1857, %v1867
        %v1873 = vmul.f32 %v1858, %v1867
        %v1874 = vmul.f32 %v1859, %v1867
        %v1875 = vmul.f32 %v1860, %v1867
        %v1876 = vmul.f32 %v1861, %v1867
        %v1877 = vadd.f32 %v1869, 0.0
        %v1878 = vadd.f32 %v1870, 0.0
        %v1879 = vadd.f32 %v1871, 0.0
        %v1880 = vadd.f32 %v1872, 0.0
        %v1881 = vadd.f32 %v1873, 0.0
        %v1882 = vadd.f32 %v1874, 0.0
        %v1883 = vadd.f32 %v1875, 0.0
        %v1884 = vadd.f32 %v1876, 0.0
        %v1885 = vld [vmem:[#allocation3 + $0x1] sm:$0xff]
        %v1886 = vld [vmem:[#allocation3 + $0x11] sm:$0xff]
        %v1887 = vld [vmem:[#allocation3 + $0x21] sm:$0xff]
        %v1888 = vld [vmem:[#allocation3 + $0x31] sm:$0xff]
        %v1889 = vld [vmem:[#allocation3 + $0x41] sm:$0xff]
        %v1890 = vld [vmem:[#allocation3 + $0x51] sm:$0xff]
        %v1891 = vld [vmem:[#allocation3 + $0x61] sm:$0xff]
        %v1892 = vld [vmem:[#allocation3 + $0x71] sm:$0xff]
        %s1893 = scalar_lea.vmem %s5, 1
        %v1894 = vld [vmem:[%s1893] sm:$0x1]
        %v1896 = vlaneseq
        %v1897 = vshrl.u32 %v1896, 7
        %v1898 = vsub.s32 0, %v1897
        %v1899 = vrot.slane %v1894, %v1898
        %v1901 = vmul.f32 %v1885, %v1899
        %v1902 = vmul.f32 %v1886, %v1899
        %v1903 = vmul.f32 %v1887, %v1899
        %v1904 = vmul.f32 %v1888, %v1899
        %v1905 = vmul.f32 %v1889, %v1899
        %v1906 = vmul.f32 %v1890, %v1899
        %v1907 = vmul.f32 %v1891, %v1899
        %v1908 = vmul.f32 %v1892, %v1899
        %v1909 = vadd.f32 %v1877, %v1901
        %v1910 = vadd.f32 %v1878, %v1902
        %v1911 = vadd.f32 %v1879, %v1903
        %v1912 = vadd.f32 %v1880, %v1904
        %v1913 = vadd.f32 %v1881, %v1905
        %v1914 = vadd.f32 %v1882, %v1906
        %v1915 = vadd.f32 %v1883, %v1907
        %v1916 = vadd.f32 %v1884, %v1908
        %v1917 = vld [vmem:[#allocation3 + $0x2] sm:$0xff]
        %v1918 = vld [vmem:[#allocation3 + $0x12] sm:$0xff]
        %v1919 = vld [vmem:[#allocation3 + $0x22] sm:$0xff]
        %v1920 = vld [vmem:[#allocation3 + $0x32] sm:$0xff]
        %v1921 = vld [vmem:[#allocation3 + $0x42] sm:$0xff]
        %v1922 = vld [vmem:[#allocation3 + $0x52] sm:$0xff]
        %v1923 = vld [vmem:[#allocation3 + $0x62] sm:$0xff]
        %v1924 = vld [vmem:[#allocation3 + $0x72] sm:$0xff]
        %s1925 = scalar_lea.vmem %s5, 2
        %v1926 = vld [vmem:[%s1925] sm:$0x1]
        %v1928 = vlaneseq
        %v1929 = vshrl.u32 %v1928, 7
        %v1930 = vsub.s32 0, %v1929
        %v1931 = vrot.slane %v1926, %v1930
        %v1933 = vmul.f32 %v1917, %v1931
        %v1934 = vmul.f32 %v1918, %v1931
        %v1935 = vmul.f32 %v1919, %v1931
        %v1936 = vmul.f32 %v1920, %v1931
        %v1937 = vmul.f32 %v1921, %v1931
        %v1938 = vmul.f32 %v1922, %v1931
        %v1939 = vmul.f32 %v1923, %v1931
        %v1940 = vmul.f32 %v1924, %v1931
        %v1941 = vadd.f32 %v1909, %v1933
        %v1942 = vadd.f32 %v1910, %v1934
        %v1943 = vadd.f32 %v1911, %v1935
        %v1944 = vadd.f32 %v1912, %v1936
        %v1945 = vadd.f32 %v1913, %v1937
        %v1946 = vadd.f32 %v1914, %v1938
        %v1947 = vadd.f32 %v1915, %v1939
        %v1948 = vadd.f32 %v1916, %v1940
        %v1949 = vld [vmem:[%s1845] sm:$0xff]
        %v1950 = vld [vmem:[%s1845 + $0x10] sm:$0xff]
        %v1951 = vld [vmem:[%s1845 + $0x20] sm:$0xff]
        %v1952 = vld [vmem:[%s1845 + $0x30] sm:$0xff]
        %v1953 = vld [vmem:[%s1845 + $0x40] sm:$0xff]
        %v1954 = vld [vmem:[%s1845 + $0x50] sm:$0xff]
        %v1955 = vld [vmem:[%s1845 + $0x60] sm:$0xff]
        %v1956 = vld [vmem:[%s1845 + $0x70] sm:$0xff]
        %s1957 = scalar_lea.vmem %s5, 3
        %v1958 = vld [vmem:[%s1957] sm:$0x1]
        %v1960 = vlaneseq
        %v1961 = vshrl.u32 %v1960, 7
        %v1962 = vsub.s32 0, %v1961
        %v1963 = vrot.slane %v1958, %v1962
        %v1965 = vmul.f32 %v1949, %v1963
        %v1966 = vmul.f32 %v1950, %v1963
        %v1967 = vmul.f32 %v1951, %v1963
        %v1968 = vmul.f32 %v1952, %v1963
        %v1969 = vmul.f32 %v1953, %v1963
        %v1970 = vmul.f32 %v1954, %v1963
        %v1971 = vmul.f32 %v1955, %v1963
        %v1972 = vmul.f32 %v1956, %v1963
        %v1973 = vadd.f32 %v1941, %v1965
        %v1974 = vadd.f32 %v1942, %v1966
        %v1975 = vadd.f32 %v1943, %v1967
        %v1976 = vadd.f32 %v1944, %v1968
        %v1977 = vadd.f32 %v1945, %v1969
        %v1978 = vadd.f32 %v1946, %v1970
        %v1979 = vadd.f32 %v1947, %v1971
        %v1980 = vadd.f32 %v1948, %v1972
        %v1981 = vld [vmem:[%s1845 + $0x1] sm:$0xff]
        %v1982 = vld [vmem:[%s1845 + $0x11] sm:$0xff]
        %v1983 = vld [vmem:[%s1845 + $0x21] sm:$0xff]
        %v1984 = vld [vmem:[%s1845 + $0x31] sm:$0xff]
        %v1985 = vld [vmem:[%s1845 + $0x41] sm:$0xff]
        %v1986 = vld [vmem:[%s1845 + $0x51] sm:$0xff]
        %v1987 = vld [vmem:[%s1845 + $0x61] sm:$0xff]
        %v1988 = vld [vmem:[%s1845 + $0x71] sm:$0xff]
        %s1989 = scalar_lea.vmem %s5, 4
        %v1990 = vld [vmem:[%s1989] sm:$0x1]
        %v1992 = vlaneseq
        %v1993 = vshrl.u32 %v1992, 7
        %v1994 = vsub.s32 0, %v1993
        %v1995 = vrot.slane %v1990, %v1994
        %v1997 = vmul.f32 %v1981, %v1995
        %v1998 = vmul.f32 %v1982, %v1995
        %v1999 = vmul.f32 %v1983, %v1995
        %v2000 = vmul.f32 %v1984, %v1995
        %v2001 = vmul.f32 %v1985, %v1995
        %v2002 = vmul.f32 %v1986, %v1995
        %v2003 = vmul.f32 %v1987, %v1995
        %v2004 = vmul.f32 %v1988, %v1995
        %v2005 = vadd.f32 %v1973, %v1997
        %v2006 = vadd.f32 %v1974, %v1998
        %v2007 = vadd.f32 %v1975, %v1999
        %v2008 = vadd.f32 %v1976, %v2000
        %v2009 = vadd.f32 %v1977, %v2001
        %v2010 = vadd.f32 %v1978, %v2002
        %v2011 = vadd.f32 %v1979, %v2003
        %v2012 = vadd.f32 %v1980, %v2004
        %v2013 = vld [vmem:[%s1845 + $0x2] sm:$0xff]
        %v2014 = vld [vmem:[%s1845 + $0x12] sm:$0xff]
        %v2015 = vld [vmem:[%s1845 + $0x22] sm:$0xff]
        %v2016 = vld [vmem:[%s1845 + $0x32] sm:$0xff]
        %v2017 = vld [vmem:[%s1845 + $0x42] sm:$0xff]
        %v2018 = vld [vmem:[%s1845 + $0x52] sm:$0xff]
        %v2019 = vld [vmem:[%s1845 + $0x62] sm:$0xff]
        %v2020 = vld [vmem:[%s1845 + $0x72] sm:$0xff]
        %s2021 = scalar_lea.vmem %s5, 5
        %v2022 = vld [vmem:[%s2021] sm:$0x1]
        %v2024 = vlaneseq
        %v2025 = vshrl.u32 %v2024, 7
        %v2026 = vsub.s32 0, %v2025
        %v2027 = vrot.slane %v2022, %v2026
        %v2029 = vmul.f32 %v2013, %v2027
        %v2030 = vmul.f32 %v2014, %v2027
        %v2031 = vmul.f32 %v2015, %v2027
        %v2032 = vmul.f32 %v2016, %v2027
        %v2033 = vmul.f32 %v2017, %v2027
        %v2034 = vmul.f32 %v2018, %v2027
        %v2035 = vmul.f32 %v2019, %v2027
        %v2036 = vmul.f32 %v2020, %v2027
        %v2037 = vadd.f32 %v2005, %v2029
        %v2038 = vadd.f32 %v2006, %v2030
        %v2039 = vadd.f32 %v2007, %v2031
        %v2040 = vadd.f32 %v2008, %v2032
        %v2041 = vadd.f32 %v2009, %v2033
        %v2042 = vadd.f32 %v2010, %v2034
        %v2043 = vadd.f32 %v2011, %v2035
        %v2044 = vadd.f32 %v2012, %v2036
        %s2045 = scalar_lea.vmem [#allocation3], 32
        %v2046 = vld [vmem:[%s2045] sm:$0xff]
        %v2047 = vld [vmem:[%s2045 + $0x10] sm:$0xff]
        %v2048 = vld [vmem:[%s2045 + $0x20] sm:$0xff]
        %v2049 = vld [vmem:[%s2045 + $0x30] sm:$0xff]
        %v2050 = vld [vmem:[%s2045 + $0x40] sm:$0xff]
        %v2051 = vld [vmem:[%s2045 + $0x50] sm:$0xff]
        %v2052 = vld [vmem:[%s2045 + $0x60] sm:$0xff]
        %v2053 = vld [vmem:[%s2045 + $0x70] sm:$0xff]
        %s2054 = scalar_lea.vmem %s5, 6
        %v2055 = vld [vmem:[%s2054] sm:$0x1]
        %v2057 = vlaneseq
        %v2058 = vshrl.u32 %v2057, 7
        %v2059 = vsub.s32 0, %v2058
        %v2060 = vrot.slane %v2055, %v2059
        %v2062 = vmul.f32 %v2046, %v2060
        %v2063 = vmul.f32 %v2047, %v2060
        %v2064 = vmul.f32 %v2048, %v2060
        %v2065 = vmul.f32 %v2049, %v2060
        %v2066 = vmul.f32 %v2050, %v2060
        %v2067 = vmul.f32 %v2051, %v2060
        %v2068 = vmul.f32 %v2052, %v2060
        %v2069 = vmul.f32 %v2053, %v2060
        %v2070 = vadd.f32 %v2037, %v2062
        %v2071 = vadd.f32 %v2038, %v2063
        %v2072 = vadd.f32 %v2039, %v2064
        %v2073 = vadd.f32 %v2040, %v2065
        %v2074 = vadd.f32 %v2041, %v2066
        %v2075 = vadd.f32 %v2042, %v2067
        %v2076 = vadd.f32 %v2043, %v2068
        %v2077 = vadd.f32 %v2044, %v2069
        %v2078 = vld [vmem:[%s2045 + $0x1] sm:$0xff]
        %v2079 = vld [vmem:[%s2045 + $0x11] sm:$0xff]
        %v2080 = vld [vmem:[%s2045 + $0x21] sm:$0xff]
        %v2081 = vld [vmem:[%s2045 + $0x31] sm:$0xff]
        %v2082 = vld [vmem:[%s2045 + $0x41] sm:$0xff]
        %v2083 = vld [vmem:[%s2045 + $0x51] sm:$0xff]
        %v2084 = vld [vmem:[%s2045 + $0x61] sm:$0xff]
        %v2085 = vld [vmem:[%s2045 + $0x71] sm:$0xff]
        %s2086 = scalar_lea.vmem %s5, 7
        %v2087 = vld [vmem:[%s2086] sm:$0x1]
        %v2089 = vlaneseq
        %v2090 = vshrl.u32 %v2089, 7
        %v2091 = vsub.s32 0, %v2090
        %v2092 = vrot.slane %v2087, %v2091
        %v2094 = vmul.f32 %v2078, %v2092
        %v2095 = vmul.f32 %v2079, %v2092
        %v2096 = vmul.f32 %v2080, %v2092
        %v2097 = vmul.f32 %v2081, %v2092
        %v2098 = vmul.f32 %v2082, %v2092
        %v2099 = vmul.f32 %v2083, %v2092
        %v2100 = vmul.f32 %v2084, %v2092
        %v2101 = vmul.f32 %v2085, %v2092
        %v2102 = vadd.f32 %v2070, %v2094
        %v2103 = vadd.f32 %v2071, %v2095
        %v2104 = vadd.f32 %v2072, %v2096
        %v2105 = vadd.f32 %v2073, %v2097
        %v2106 = vadd.f32 %v2074, %v2098
        %v2107 = vadd.f32 %v2075, %v2099
        %v2108 = vadd.f32 %v2076, %v2100
        %v2109 = vadd.f32 %v2077, %v2101
        %v2110 = vld [vmem:[%s2045 + $0x2] sm:$0xff]
        %v2111 = vld [vmem:[%s2045 + $0x12] sm:$0xff]
        %v2112 = vld [vmem:[%s2045 + $0x22] sm:$0xff]
        %v2113 = vld [vmem:[%s2045 + $0x32] sm:$0xff]
        %v2114 = vld [vmem:[%s2045 + $0x42] sm:$0xff]
        %v2115 = vld [vmem:[%s2045 + $0x52] sm:$0xff]
        %v2116 = vld [vmem:[%s2045 + $0x62] sm:$0xff]
        %v2117 = vld [vmem:[%s2045 + $0x72] sm:$0xff]
        %s2118 = scalar_lea.vmem %s5, 8
        %v2119 = vld [vmem:[%s2118] sm:$0x1]
        %v2121 = vlaneseq
        %v2122 = vshrl.u32 %v2121, 7
        %v2123 = vsub.s32 0, %v2122
        %v2124 = vrot.slane %v2119, %v2123
        %v2126 = vmul.f32 %v2110, %v2124
        %v2127 = vmul.f32 %v2111, %v2124
        %v2128 = vmul.f32 %v2112, %v2124
        %v2129 = vmul.f32 %v2113, %v2124
        %v2130 = vmul.f32 %v2114, %v2124
        %v2131 = vmul.f32 %v2115, %v2124
        %v2132 = vmul.f32 %v2116, %v2124
        %v2133 = vmul.f32 %v2117, %v2124
        %v2134 = vadd.f32 %v2102, %v2126
        %v2135 = vadd.f32 %v2103, %v2127
        %v2136 = vadd.f32 %v2104, %v2128
        %v2137 = vadd.f32 %v2105, %v2129
        %v2138 = vadd.f32 %v2106, %v2130
        %v2139 = vadd.f32 %v2107, %v2131
        %v2140 = vadd.f32 %v2108, %v2132
        %v2141 = vadd.f32 %v2109, %v2133
        %v2142 = vld [vmem:[%s6] sm:$0x1]
        %v2144 = vlaneseq
        %v2145 = vshrl.u32 %v2144, 7
        %v2146 = vsub.s32 0, %v2145
        %v2147 = vrot.slane %v2142, %v2146
        %v2149 = vadd.f32 %v2134, %v2147
        %v2150 = vadd.f32 %v2135, %v2147
        %v2151 = vadd.f32 %v2136, %v2147
        %v2152 = vadd.f32 %v2137, %v2147
        %v2153 = vadd.f32 %v2138, %v2147
        %v2154 = vadd.f32 %v2139, %v2147
        %v2155 = vadd.f32 %v2140, %v2147
        %v2156 = vadd.f32 %v2141, %v2147
        %v2157 = vmax.f32 %v2149, 0.0
        %v2158 = vmax.f32 %v2150, 0.0
        %v2159 = vmax.f32 %v2151, 0.0
        %v2160 = vmax.f32 %v2152, 0.0
        %v2161 = vmax.f32 %v2153, 0.0
        %v2162 = vmax.f32 %v2154, 0.0
        %v2163 = vmax.f32 %v2155, 0.0
        %v2164 = vmax.f32 %v2156, 0.0
        %2165 = vst.msk [vmem:[%s271] sm:$0xff] %vm1823, %v2157
        %2166 = vst.msk [vmem:[%s271 + $0x8] sm:$0xff] %vm1823, %v2158
        %2167 = vst.msk [vmem:[%s271 + $0x10] sm:$0xff] %vm1823, %v2159
        %2168 = vst.msk [vmem:[%s271 + $0x18] sm:$0xff] %vm1823, %v2160
        %2169 = vst.msk [vmem:[%s271 + $0x20] sm:$0xff] %vm1823, %v2161
        %2170 = vst.msk [vmem:[%s271 + $0x28] sm:$0xff] %vm1823, %v2162
        %2171 = vst.msk [vmem:[%s271 + $0x30] sm:$0xff] %vm1823, %v2163
        %2172 = vst.msk [vmem:[%s271 + $0x38] sm:$0xff] %vm1823, %v2164
        %s2173 = sand.u32 %s181, 1
        %s2174 = scalar_lea.sflag [#allocation5], %s2173
        %s2175 = sand.u32 %s181, 1
        %s2176 = smul.addr %s2175, 64
        %s2177 = scalar_lea.vmem [#allocation4], %s2176
        // Predicated region
        $region49: #{lite_stem_forward.1} parent=47 // pred_check
          %p2178 = pneg %p191
        $region50: #{lite_stem_forward.1} parent=47 // pred_check_branch
          %2180 = sbr.rel (%p2178) target = $region52
        $region51: #{lite_stem_forward.1} parent=47 // pred_region
          %s2182 = ssub.s32 1024, 1024
          %2183 = vsyncadd %s2174, %s2182
          %s2184 = smul.addr %s21, 8
          %s2185 = smul.addr %s2184, 128
          %s2186 = scalar_lea.hbm %s7, %s2185
          %s2187 = sshll.u32 %s2177, 4
          %s2188 = int_to_ptr.vmem [resolvable:$true] %s2187
          %2193 = dma.vmem_to_hbm [thread:$0]  %s2188, 1024, %s2186, %s2174, 128, 128, 8
        $region52: #{lite_stem_forward.1} parent=47 // pred_fallthru
          _
      $region48: #{lite_stem_forward.1} parent=5 // pred_fallthru
        _
      %p2194 = scmp.le.s32.totalorder 2, %s16
      // Predicated region
      $region53: #{lite_stem_forward.1} parent=5 // pred_check
        %p2195 = pneg %p2194
      $region54: #{lite_stem_forward.1} parent=5 // pred_check_branch
        %2197 = sbr.rel (%p2195) target = $region56
      $region55: #{lite_stem_forward.1} parent=5 // pred_region
        %s2198 = ssub.s32 %s16, 2
        // Predicated region
        $region57: #{lite_stem_forward.1} parent=55 // pred_check
          %p2199 = pneg %p197
        $region58: #{lite_stem_forward.1} parent=55 // pred_check_branch
          %2201 = sbr.rel (%p2199) target = $region60
        $region59: #{lite_stem_forward.1} parent=55 // pred_region
          %s2202 = sand.u32 %s182, 1
          %s2203 = scalar_lea.sflag [#allocation5], %s2202
          %s2204 = sand.u32 %s182, 1
          %s2205 = smul.addr %s2204, 64
          %s2206 = scalar_lea.vmem [#allocation4], %s2205
          %2207 = dma.done %s2203, 1024
        $region60: #{lite_stem_forward.1} parent=55 // pred_fallthru
          _
      $region56: #{lite_stem_forward.1} parent=5 // pred_fallthru
        _
    $region6: #{lite_stem_forward.1} parent=1 // loop_footer
      %s20 = sadd.s32 1, %s16
    $region7: #{lite_stem_forward.1} parent=1 // loop_footer_branch
      %15 = sbr.rel target = $region3
    $region8: #{lite_stem_forward.1} parent=1 // loop_exit
      _
    %2208 = vsyncpa [#allocation5], 1
    %s2209 = scalar_lea.sflag [#allocation5], 1
    %2210 = vsyncpa %s2209, 1

</llo_original>
